<compile_context>
chip_gen: v7x
topology: tpu7x:2x2x1
jax: 0.10.0
libtpu: 0.0.40
codegen_flags: <defaults>
</compile_context>

<pallas_src>
import functools
import math

import jax
import jax.numpy as jnp
from jax.experimental import pallas as pl
from jax.experimental.pallas import tpu as pltpu

# ---- small synthetic config (CLIP-text-style encoder behind NeuronTextEncoder) ----
VOCAB = 1000
B = 1          # batch (original script: emb is [1, 77])
S = 8          # sequence length (small stand-in for 77)
D = 32         # hidden size
H = 4          # attention heads
DH = D // H    # head dim
MLP = 4 * D    # MLP intermediate size (=128, lane aligned)
LAYERS = 2
EPS = 1e-5     # CLIP layer_norm_eps

_NEG = -1e30
_SQRT_2_OVER_PI = math.sqrt(2.0 / math.pi)

# packed per-layer vector rows (all padded to VEC_W lanes)
_ROW_LN1_G, _ROW_LN1_B, _ROW_BQKV, _ROW_BO, _ROW_LN2_G, _ROW_LN2_B, _ROW_B1, _ROW_B2 = range(8)
VEC_W = max(128, MLP, 3 * D)


# ------------------------------- fused Pallas kernel -------------------------------

def _ln(x, g, b, eps):
    mu = jnp.mean(x, axis=-1, keepdims=True)
    xc = x - mu
    var = jnp.mean(xc * xc, axis=-1, keepdims=True)
    return xc * jax.lax.rsqrt(var + eps) * g + b


def _gelu(x):
    # tanh-approx GELU; tanh rides the otherwise-idle EUP slot.
    # TODO(synk): real SD2 text encoder uses exact erf GELU (OpenCLIP) / quick_gelu (CLIP);
    # switch once erf lowering on Mosaic is confirmed.
    return 0.5 * x * (1.0 + jnp.tanh(_SQRT_2_OVER_PI * (x + 0.044715 * x * x * x)))


def _encoder_stack_kernel(
    # inputs
    x_ref, wqkv_ref, wo_ref, w1_ref, w2_ref, vecs_ref, lnf_ref,
    # outputs
    o_ref,
    *, eps, n_heads, head_dim, n_layers, mlp):
    d = n_heads * head_dim

    x = x_ref[...].astype(jnp.float32)                    # (M, D) residual stream (SSA)
    n = x.shape[0]

    # causal additive bias, built once for all layers (hoisted out of the layer loop)
    row = jax.lax.broadcasted_iota(jnp.int32, (n, n), 0)
    col = jax.lax.broadcasted_iota(jnp.int32, (n, n), 1)
    mask_bias = jnp.where(col <= row, 0.0, _NEG).astype(jnp.float32)

    for l in range(n_layers):                             # static unroll over layers
        vl = vecs_ref[l]                                  # (8, VEC_W) packed small vectors
        ln1_g = vl[_ROW_LN1_G:_ROW_LN1_G + 1, :d]
        ln1_b = vl[_ROW_LN1_B:_ROW_LN1_B + 1, :d]
        bqkv = vl[_ROW_BQKV:_ROW_BQKV + 1, :3 * d]        # Q part already pre-scaled
        bo = vl[_ROW_BO:_ROW_BO + 1, :d]
        ln2_g = vl[_ROW_LN2_G:_ROW_LN2_G + 1, :d]
        ln2_b = vl[_ROW_LN2_B:_ROW_LN2_B + 1, :d]
        b1 = vl[_ROW_B1:_ROW_B1 + 1, :mlp]
        b2 = vl[_ROW_B2:_ROW_B2 + 1, :d]

        # ---- attention block: LN1 -> fused QKV -> causal MHA -> out proj -> residual ----
        h = _ln(x, ln1_g, ln1_b, eps)
        qkv = jnp.dot(h.astype(jnp.bfloat16), wqkv_ref[l],
                      preferred_element_type=jnp.float32) + bqkv          # (M, 3D) SSA

        # heads are tiny (S=8, DH=8): statically unrolled, all operands register-resident;
        # merged output is built with one lane-dense concatenate (no masked column stores).
        # TODO(synk): at real DH=64, process 2 heads per MXU pass (128 output lanes) with a
        # lane-contiguous (H, S, DH) layout instead of slicing width-DH columns.
        heads = []
        for hh in range(n_heads):
            lo = hh * head_dim
            qh = qkv[:, lo:lo + head_dim]                  # scale folded into weights
            kh = qkv[:, d + lo:d + lo + head_dim]
            vh = qkv[:, 2 * d + lo:2 * d + lo + head_dim]
            s = jax.lax.dot_general(qh, kh, (((1,), (1,)), ((), ())),
                                    preferred_element_type=jnp.float32) + mask_bias
            m = jnp.max(s, axis=-1, keepdims=True)
            p = jnp.exp(s - m)
            p = p * pl.reciprocal(jnp.sum(p, axis=-1, keepdims=True), approx=True)
            heads.append(jnp.dot(p, vh, preferred_element_type=jnp.float32))
        attn = jnp.concatenate(heads, axis=-1)             # (M, D), lane-dense

        x = x + (jnp.dot(attn.astype(jnp.bfloat16), wo_ref[l],
                         preferred_element_type=jnp.float32) + bo)

        # ---- MLP block: LN2 -> up proj -> GELU -> down proj -> residual ----
        h = _ln(x, ln2_g, ln2_b, eps)
        up = jnp.dot(h.astype(jnp.bfloat16), w1_ref[l],
                     preferred_element_type=jnp.float32) + b1             # (M, MLP)
        g = _gelu(up)
        x = x + (jnp.dot(g.astype(jnp.bfloat16), w2_ref[l],
                         preferred_element_type=jnp.float32) + b2)

    # final LayerNorm -> last_hidden_state
    o_ref[...] = _ln(x, lnf_ref[0:1, :], lnf_ref[1:2, :], eps).astype(o_ref.dtype)


def encoder_stack(x, packed):
    """Run the full fused transformer stack (all layers + final LN) in one pallas_call."""
    M, Dd = x.shape
    L = packed["wqkv"].shape[0]
    mlp = packed["w1"].shape[2]

    def full(a):
        nd = a.ndim
        return pl.BlockSpec(a.shape, lambda *_, _nd=nd: (0,) * _nd)

    kernel = functools.partial(
        _encoder_stack_kernel, eps=EPS, n_heads=H, head_dim=DH, n_layers=L, mlp=mlp)

    # NOTE: at real SD2 sizes (S=77, D=1024, MLP=4096, 23 layers) the all-layer weight set
    # no longer fits VMEM: reinstate a grid=(L,) streaming axis ("arbitrary") with
    # pipeline_mode=pl.Buffered(2) weight specs, raise vmem_limit_bytes accordingly, add a
    # leading "parallel" row-tile axis for v7x's 2 TensorCores, and quantize streamed
    # weights (fp8 on v7x, int8 on v5e/v6e) since batch-1 latency is weight-HBM bound.
    return pl.pallas_call(
        kernel,
        out_shape=jax.ShapeDtypeStruct((M, Dd), jnp.float32),
        in_specs=[
            full(x),                 # embedded hidden states
            full(packed["wqkv"]),    # (L, D, 3D) bf16, Q pre-scaled
            full(packed["wo"]),      # (L, D, D)  bf16
            full(packed["w1"]),      # (L, D, MLP) bf16
            full(packed["w2"]),      # (L, MLP, D) bf16
            full(packed["vecs"]),    # (L, 8, VEC_W) f32 packed LN params + biases
            full(packed["lnf"]),     # (2, D) final LN gamma/beta
        ],
        out_specs=pl.BlockSpec((M, Dd), lambda *_: (0, 0)),
        compiler_params=pltpu.CompilerParams(
            vmem_limit_bytes=32 * 1024 * 1024),
    )(x, packed["wqkv"], packed["wo"], packed["w1"], packed["w2"],
      packed["vecs"], packed["lnf"])


# ------------------------------- model glue (plain JAX) -------------------------------

@jax.jit
def _forward_jit(packed, emb):
    # token + position embedding lookup (gather stays in plain JAX glue)
    # TODO(synk): fold the embedding gather into the fused kernel via scalar-prefetch DMA gather.
    x = jnp.take(packed["tok_emb"], emb, axis=0) + packed["pos_emb"][None, :, :]
    x = x.reshape(B * S, D).astype(jnp.float32)
    return encoder_stack(x, packed).reshape(B, S, D)


def neuron_text_encoder_forward(packed, emb, attention_mask=None):
    """Mirror of NeuronTextEncoder.forward: returns [last_hidden_state].

    attention_mask is accepted but unused, matching the wrapper which calls
    text_encoder(emb) without it (only the causal mask is applied)."""
    return [_forward_jit(packed, emb)]


# ------------------------------- params -------------------------------

def init_params(key):
    def dense(k, fan_in, fan_out):
        return 0.02 * jax.random.normal(k, (fan_in, fan_out), jnp.float32)

    keys = jax.random.split(key, 4 + LAYERS)
    params = {
        "tok_emb": 0.02 * jax.random.normal(keys[0], (VOCAB, D), jnp.float32),
        "pos_emb": 0.02 * jax.random.normal(keys[1], (S, D), jnp.float32),
        "lnf_g": jnp.ones((D,), jnp.float32),
        "lnf_b": jnp.zeros((D,), jnp.float32),
        "layers": [],
    }
    for li in range(LAYERS):
        ks = jax.random.split(keys[4 + li], 6)
        params["layers"].append({
            "ln1_g": jnp.ones((D,), jnp.float32),
            "ln1_b": jnp.zeros((D,), jnp.float32),
            "wq": dense(ks[0], D, D), "bq": jnp.zeros((D,), jnp.float32),
            "wk": dense(ks[1], D, D), "bk": jnp.zeros((D,), jnp.float32),
            "wv": dense(ks[2], D, D), "bv": jnp.zeros((D,), jnp.float32),
            "wo": dense(ks[3], D, D), "bo": jnp.zeros((D,), jnp.float32),
            "ln2_g": jnp.ones((D,), jnp.float32),
            "ln2_b": jnp.zeros((D,), jnp.float32),
            "w1": dense(ks[4], D, MLP), "b1": jnp.zeros((MLP,), jnp.float32),
            "w2": dense(ks[5], MLP, D), "b2": jnp.zeros((D,), jnp.float32),
        })
    return params


def pack_params(params):
    """Stack per-layer weights (layer-major), fuse QKV (Q pre-scaled by DH**-0.5),
    cast matmul weights to bf16, and consolidate all tiny per-layer vectors into one
    (L, 8, VEC_W) f32 array."""
    layers = params["layers"]
    scale = DH ** -0.5

    # fused QKV with the attention scale folded into the Q columns (exact:
    # (h@wq + bq)*scale == h@(wq*scale) + bq*scale)
    wqkv = jnp.stack(
        [jnp.concatenate([lp["wq"] * scale, lp["wk"], lp["wv"]], axis=1) for lp in layers],
        axis=0).astype(jnp.bfloat16)                                   # (L, D, 3D)
    wo = jnp.stack([lp["wo"] for lp in layers], axis=0).astype(jnp.bfloat16)
    w1 = jnp.stack([lp["w1"] for lp in layers], axis=0).astype(jnp.bfloat16)
    w2 = jnp.stack([lp["w2"] for lp in layers], axis=0).astype(jnp.bfloat16)

    def pad(v):
        return jnp.pad(v, (0, VEC_W - v.shape[0]))

    vec_rows = []
    for lp in layers:
        rows = [None] * 8
        rows[_ROW_LN1_G] = pad(lp["ln1_g"])
        rows[_ROW_LN1_B] = pad(lp["ln1_b"])
        rows[_ROW_BQKV] = pad(jnp.concatenate([lp["bq"] * scale, lp["bk"], lp["bv"]]))
        rows[_ROW_BO] = pad(lp["bo"])
        rows[_ROW_LN2_G] = pad(lp["ln2_g"])
        rows[_ROW_LN2_B] = pad(lp["ln2_b"])
        rows[_ROW_B1] = pad(lp["b1"])
        rows[_ROW_B2] = pad(lp["b2"])
        vec_rows.append(jnp.stack(rows, axis=0))
    vecs = jnp.stack(vec_rows, axis=0)                                 # (L, 8, VEC_W) f32

    lnf = jnp.stack([params["lnf_g"], params["lnf_b"]], axis=0)        # (2, D)

    return {
        "tok_emb": params["tok_emb"],
        "pos_emb": params["pos_emb"],
        "wqkv": wqkv, "wo": wo, "w1": w1, "w2": w2,
        "vecs": vecs, "lnf": lnf,
    }


# ------------------------------- pure-JAX reference (f32) -------------------------------

def _reference_forward(params, emb):
    x = jnp.take(params["tok_emb"], emb, axis=0) + params["pos_emb"][None, :, :]
    x = x.reshape(B * S, D).astype(jnp.float32)

    def ln(v, g, b):
        mu = jnp.mean(v, -1, keepdims=True)
        vc = v - mu
        var = jnp.mean(vc * vc, -1, keepdims=True)
        return vc * jax.lax.rsqrt(var + EPS) * g + b

    def split_heads(t):
        return t.reshape(B, S, H, DH).transpose(0, 2, 1, 3).reshape(B * H, S, DH)

    def merge_heads(t):
        return t.reshape(B, H, S, DH).transpose(0, 2, 1, 3).reshape(B * S, D)

    mask = jnp.where(jnp.arange(S)[:, None] >= jnp.arange(S)[None, :], 0.0, _NEG)

    for p in params["layers"]:
        res = x
        h = ln(x, p["ln1_g"], p["ln1_b"])
        q = split_heads(h @ p["wq"] + p["bq"]) * (DH ** -0.5)
        k = split_heads(h @ p["wk"] + p["bk"])
        v = split_heads(h @ p["wv"] + p["bv"])
        s = jnp.einsum("hqd,hkd->hqk", q, k) + mask[None]
        a = jax.nn.softmax(s, axis=-1)
        o = merge_heads(jnp.einsum("hqk,hkd->hqd", a, v))
        x = res + (o @ p["wo"] + p["bo"])
        res = x
        h = ln(x, p["ln2_g"], p["ln2_b"])
        h = h @ p["w1"] + p["b1"]
        h = 0.5 * h * (1.0 + jnp.tanh(_SQRT_2_OVER_PI * (h + 0.044715 * h ** 3)))
        x = res + (h @ p["w2"] + p["b2"])
    x = ln(x, params["lnf_g"], params["lnf_b"])
    return x.reshape(B, S, D)


if __name__ == "__main__":
    key = jax.random.PRNGKey(0)
    params = init_params(key)
    packed = pack_params(params)

    # Token ids analogous to the PyTorch `emb` tensor (BOS, prompt tokens, EOS, padding),
    # reduced to the small synthetic vocab / sequence length.
    emb = jnp.array([[1, 37, 525, 496, 2, 0, 0, 0]], dtype=jnp.int32)
    assert emb.shape == (B, S)

    out = neuron_text_encoder_forward(packed, emb)       # -> [last_hidden_state]
    last_hidden = jax.block_until_ready(out[0])

    assert isinstance(out, list) and len(out) == 1
    assert last_hidden.shape == (B, S, D)
    assert last_hidden.dtype == jnp.float32
    assert bool(jnp.all(jnp.isfinite(last_hidden)))

    # sanity check against a pure-f32 JAX reference (loose tol: bf16 weights in kernel)
    ref = _reference_forward(params, emb)
    max_err = float(jnp.max(jnp.abs(last_hidden - ref)))
    assert bool(jnp.allclose(last_hidden, ref, atol=5e-2, rtol=5e-2)), max_err

    print("KERNEL_OK")
</pallas_src>

<mosaic_0001>
module attributes {stable_mosaic.version = 11 : i64} {
  func.func @_encoder_stack_kernel(%arg0: memref<8x32xf32, #tpu.memory_space<vmem>>, %arg1: memref<2x32x96xbf16, #tpu.memory_space<vmem>>, %arg2: memref<2x32x32xbf16, #tpu.memory_space<vmem>>, %arg3: memref<2x32x128xbf16, #tpu.memory_space<vmem>>, %arg4: memref<2x128x32xbf16, #tpu.memory_space<vmem>>, %arg5: memref<2x8x128xf32, #tpu.memory_space<vmem>>, %arg6: memref<2x32xf32, #tpu.memory_space<vmem>>, %arg7: memref<8x32xf32, #tpu.memory_space<vmem>>) attributes {dimension_semantics = [], scalar_prefetch = 0 : i64, scratch_operands = 0 : i64, tpu.core_type = #tpu.core_type<tc>} {
    %c0 = arith.constant 0 : index
    %c0_0 = arith.constant 0 : index
    %0 = vector.load %arg0[%c0, %c0_0] : memref<8x32xf32, #tpu.memory_space<vmem>>, vector<8x32xf32>
    %1 = tpu.iota {dimensions = array<i32: 0>} : vector<8x8xi32>
    %2 = tpu.iota {dimensions = array<i32: 1>} : vector<8x8xi32>
    %3 = arith.cmpi sle, %2, %1 : vector<8x8xi32>
    %cst = arith.constant 0.000000e+00 : f32
    %cst_1 = arith.constant -1.000000e+30 : f32
    %4 = vector.broadcast %cst : f32 to vector<8x8xf32>
    %5 = vector.broadcast %cst_1 : f32 to vector<8x8xf32>
    %6 = arith.select %3, %4, %5 : vector<8x8xi1>, vector<8x8xf32>
    %c0_2 = arith.constant 0 : index
    %c0_3 = arith.constant 0 : index
    %c0_4 = arith.constant 0 : index
    %7 = vector.load %arg5[%c0_2, %c0_3, %c0_4] : memref<2x8x128xf32, #tpu.memory_space<vmem>>, vector<1x8x128xf32>
    %8 = vector.shape_cast %7 : vector<1x8x128xf32> to vector<8x128xf32>
    %9 = vector.extract_strided_slice %8 {offsets = [0, 0], sizes = [1, 32], strides = [1, 1]} : vector<8x128xf32> to vector<1x32xf32>
    %10 = vector.extract_strided_slice %8 {offsets = [1, 0], sizes = [1, 32], strides = [1, 1]} : vector<8x128xf32> to vector<1x32xf32>
    %11 = vector.extract_strided_slice %8 {offsets = [2, 0], sizes = [1, 96], strides = [1, 1]} : vector<8x128xf32> to vector<1x96xf32>
    %12 = vector.extract_strided_slice %8 {offsets = [3, 0], sizes = [1, 32], strides = [1, 1]} : vector<8x128xf32> to vector<1x32xf32>
    %13 = vector.extract_strided_slice %8 {offsets = [4, 0], sizes = [1, 32], strides = [1, 1]} : vector<8x128xf32> to vector<1x32xf32>
    %14 = vector.extract_strided_slice %8 {offsets = [5, 0], sizes = [1, 32], strides = [1, 1]} : vector<8x128xf32> to vector<1x32xf32>
    %15 = vector.extract_strided_slice %8 {offsets = [6, 0], sizes = [1, 128], strides = [1, 1]} : vector<8x128xf32> to vector<1x128xf32>
    %16 = vector.extract_strided_slice %8 {offsets = [7, 0], sizes = [1, 32], strides = [1, 1]} : vector<8x128xf32> to vector<1x32xf32>
    %cst_5 = arith.constant dense<0.000000e+00> : vector<8xf32>
    %17 = vector.multi_reduction <add>, %0, %cst_5 [1] : vector<8x32xf32> to vector<8xf32>
    %18 = vector.shape_cast %17 : vector<8xf32> to vector<8x1xf32>
    %cst_6 = arith.constant 3.200000e+01 : f32
    %19 = vector.broadcast %cst_6 : f32 to vector<8x1xf32>
    %20 = arith.divf %18, %19 : vector<8x1xf32>
    %21 = vector.broadcast %20 : vector<8x1xf32> to vector<8x32xf32>
    %22 = arith.subf %0, %21 : vector<8x32xf32>
    %23 = arith.mulf %22, %22 : vector<8x32xf32>
    %cst_7 = arith.constant dense<0.000000e+00> : vector<8xf32>
    %24 = vector.multi_reduction <add>, %23, %cst_7 [1] : vector<8x32xf32> to vector<8xf32>
    %25 = vector.shape_cast %24 : vector<8xf32> to vector<8x1xf32>
    %cst_8 = arith.constant 3.200000e+01 : f32
    %26 = vector.broadcast %cst_8 : f32 to vector<8x1xf32>
    %27 = arith.divf %25, %26 : vector<8x1xf32>
    %cst_9 = arith.constant 9.99999974E-6 : f32
    %28 = vector.broadcast %cst_9 : f32 to vector<8x1xf32>
    %29 = arith.addf %27, %28 : vector<8x1xf32>
    %30 = math.rsqrt %29 : vector<8x1xf32>
    %31 = vector.broadcast %30 : vector<8x1xf32> to vector<8x32xf32>
    %32 = arith.mulf %22, %31 : vector<8x32xf32>
    %33 = vector.broadcast %9 : vector<1x32xf32> to vector<8x32xf32>
    %34 = arith.mulf %32, %33 : vector<8x32xf32>
    %35 = vector.broadcast %10 : vector<1x32xf32> to vector<8x32xf32>
    %36 = arith.addf %34, %35 : vector<8x32xf32>
    %37 = arith.truncf %36 : vector<8x32xf32> to vector<8x32xbf16>
    %c0_10 = arith.constant 0 : index
    %c0_11 = arith.constant 0 : index
    %c0_12 = arith.constant 0 : index
    %38 = vector.load %arg1[%c0_10, %c0_11, %c0_12] : memref<2x32x96xbf16, #tpu.memory_space<vmem>>, vector<1x32x96xbf16>
    %39 = vector.shape_cast %38 : vector<1x32x96xbf16> to vector<32x96xbf16>
    %cst_13 = arith.constant dense<0.000000e+00> : vector<8x96xf32>
    %40 = tpu.matmul %37, %39, %cst_13 {dimension_numbers = #tpu.dot_dimension_numbers<[1], [0], [0], [1], [0, 0, 1, 1], [], []>} : vector<8x32xbf16>, vector<32x96xbf16>, vector<8x96xf32> -> vector<8x96xf32>
    %41 = vector.broadcast %11 : vector<1x96xf32> to vector<8x96xf32>
    %42 = arith.addf %40, %41 : vector<8x96xf32>
    %43 = vector.extract_strided_slice %42 {offsets = [0, 0], sizes = [8, 8], strides = [1, 1]} : vector<8x96xf32> to vector<8x8xf32>
    %44 = vector.extract_strided_slice %42 {offsets = [0, 32], sizes = [8, 8], strides = [1, 1]} : vector<8x96xf32> to vector<8x8xf32>
    %45 = vector.extract_strided_slice %42 {offsets = [0, 64], sizes = [8, 8], strides = [1, 1]} : vector<8x96xf32> to vector<8x8xf32>
    %cst_14 = arith.constant dense<0.000000e+00> : vector<8x8xf32>
    %46 = tpu.matmul %43, %44, %cst_14 {dimension_numbers = #tpu.dot_dimension_numbers<[1], [1], [0], [0], [0, 0, 1, 0], [], []>} : vector<8x8xf32>, vector<8x8xf32>, vector<8x8xf32> -> vector<8x8xf32>
    %47 = arith.addf %46, %6 : vector<8x8xf32>
    %cst_15 = arith.constant dense<0xFF800000> : vector<8xf32>
    %48 = vector.multi_reduction <maximumf>, %47, %cst_15 [1] : vector<8x8xf32> to vector<8xf32>
    %49 = vector.shape_cast %48 : vector<8xf32> to vector<8x1xf32>
    %50 = vector.broadcast %49 : vector<8x1xf32> to vector<8x8xf32>
    %51 = arith.subf %47, %50 : vector<8x8xf32>
    %52 = math.exp %51 : vector<8x8xf32>
    %cst_16 = arith.constant dense<0.000000e+00> : vector<8xf32>
    %53 = vector.multi_reduction <add>, %52, %cst_16 [1] : vector<8x8xf32> to vector<8xf32>
    %54 = vector.shape_cast %53 : vector<8xf32> to vector<8x1xf32>
    %55 = tpu.reciprocal %54 {approx = true} : vector<8x1xf32> -> vector<8x1xf32>
    %56 = vector.broadcast %55 : vector<8x1xf32> to vector<8x8xf32>
    %57 = arith.mulf %52, %56 : vector<8x8xf32>
    %cst_17 = arith.constant dense<0.000000e+00> : vector<8x8xf32>
    %58 = tpu.matmul %57, %45, %cst_17 {dimension_numbers = #tpu.dot_dimension_numbers<[1], [0], [0], [1], [0, 0, 1, 1], [], []>} : vector<8x8xf32>, vector<8x8xf32>, vector<8x8xf32> -> vector<8x8xf32>
    %59 = vector.extract_strided_slice %42 {offsets = [0, 8], sizes = [8, 8], strides = [1, 1]} : vector<8x96xf32> to vector<8x8xf32>
    %60 = vector.extract_strided_slice %42 {offsets = [0, 40], sizes = [8, 8], strides = [1, 1]} : vector<8x96xf32> to vector<8x8xf32>
    %61 = vector.extract_strided_slice %42 {offsets = [0, 72], sizes = [8, 8], strides = [1, 1]} : vector<8x96xf32> to vector<8x8xf32>
    %cst_18 = arith.constant dense<0.000000e+00> : vector<8x8xf32>
    %62 = tpu.matmul %59, %60, %cst_18 {dimension_numbers = #tpu.dot_dimension_numbers<[1], [1], [0], [0], [0, 0, 1, 0], [], []>} : vector<8x8xf32>, vector<8x8xf32>, vector<8x8xf32> -> vector<8x8xf32>
    %63 = arith.addf %62, %6 : vector<8x8xf32>
    %cst_19 = arith.constant dense<0xFF800000> : vector<8xf32>
    %64 = vector.multi_reduction <maximumf>, %63, %cst_19 [1] : vector<8x8xf32> to vector<8xf32>
    %65 = vector.shape_cast %64 : vector<8xf32> to vector<8x1xf32>
    %66 = vector.broadcast %65 : vector<8x1xf32> to vector<8x8xf32>
    %67 = arith.subf %63, %66 : vector<8x8xf32>
    %68 = math.exp %67 : vector<8x8xf32>
    %cst_20 = arith.constant dense<0.000000e+00> : vector<8xf32>
    %69 = vector.multi_reduction <add>, %68, %cst_20 [1] : vector<8x8xf32> to vector<8xf32>
    %70 = vector.shape_cast %69 : vector<8xf32> to vector<8x1xf32>
    %71 = tpu.reciprocal %70 {approx = true} : vector<8x1xf32> -> vector<8x1xf32>
    %72 = vector.broadcast %71 : vector<8x1xf32> to vector<8x8xf32>
    %73 = arith.mulf %68, %72 : vector<8x8xf32>
    %cst_21 = arith.constant dense<0.000000e+00> : vector<8x8xf32>
    %74 = tpu.matmul %73, %61, %cst_21 {dimension_numbers = #tpu.dot_dimension_numbers<[1], [0], [0], [1], [0, 0, 1, 1], [], []>} : vector<8x8xf32>, vector<8x8xf32>, vector<8x8xf32> -> vector<8x8xf32>
    %75 = vector.extract_strided_slice %42 {offsets = [0, 16], sizes = [8, 8], strides = [1, 1]} : vector<8x96xf32> to vector<8x8xf32>
    %76 = vector.extract_strided_slice %42 {offsets = [0, 48], sizes = [8, 8], strides = [1, 1]} : vector<8x96xf32> to vector<8x8xf32>
    %77 = vector.extract_strided_slice %42 {offsets = [0, 80], sizes = [8, 8], strides = [1, 1]} : vector<8x96xf32> to vector<8x8xf32>
    %cst_22 = arith.constant dense<0.000000e+00> : vector<8x8xf32>
    %78 = tpu.matmul %75, %76, %cst_22 {dimension_numbers = #tpu.dot_dimension_numbers<[1], [1], [0], [0], [0, 0, 1, 0], [], []>} : vector<8x8xf32>, vector<8x8xf32>, vector<8x8xf32> -> vector<8x8xf32>
    %79 = arith.addf %78, %6 : vector<8x8xf32>
    %cst_23 = arith.constant dense<0xFF800000> : vector<8xf32>
    %80 = vector.multi_reduction <maximumf>, %79, %cst_23 [1] : vector<8x8xf32> to vector<8xf32>
    %81 = vector.shape_cast %80 : vector<8xf32> to vector<8x1xf32>
    %82 = vector.broadcast %81 : vector<8x1xf32> to vector<8x8xf32>
    %83 = arith.subf %79, %82 : vector<8x8xf32>
    %84 = math.exp %83 : vector<8x8xf32>
    %cst_24 = arith.constant dense<0.000000e+00> : vector<8xf32>
    %85 = vector.multi_reduction <add>, %84, %cst_24 [1] : vector<8x8xf32> to vector<8xf32>
    %86 = vector.shape_cast %85 : vector<8xf32> to vector<8x1xf32>
    %87 = tpu.reciprocal %86 {approx = true} : vector<8x1xf32> -> vector<8x1xf32>
    %88 = vector.broadcast %87 : vector<8x1xf32> to vector<8x8xf32>
    %89 = arith.mulf %84, %88 : vector<8x8xf32>
    %cst_25 = arith.constant dense<0.000000e+00> : vector<8x8xf32>
    %90 = tpu.matmul %89, %77, %cst_25 {dimension_numbers = #tpu.dot_dimension_numbers<[1], [0], [0], [1], [0, 0, 1, 1], [], []>} : vector<8x8xf32>, vector<8x8xf32>, vector<8x8xf32> -> vector<8x8xf32>
    %91 = vector.extract_strided_slice %42 {offsets = [0, 24], sizes = [8, 8], strides = [1, 1]} : vector<8x96xf32> to vector<8x8xf32>
    %92 = vector.extract_strided_slice %42 {offsets = [0, 56], sizes = [8, 8], strides = [1, 1]} : vector<8x96xf32> to vector<8x8xf32>
    %93 = vector.extract_strided_slice %42 {offsets = [0, 88], sizes = [8, 8], strides = [1, 1]} : vector<8x96xf32> to vector<8x8xf32>
    %cst_26 = arith.constant dense<0.000000e+00> : vector<8x8xf32>
    %94 = tpu.matmul %91, %92, %cst_26 {dimension_numbers = #tpu.dot_dimension_numbers<[1], [1], [0], [0], [0, 0, 1, 0], [], []>} : vector<8x8xf32>, vector<8x8xf32>, vector<8x8xf32> -> vector<8x8xf32>
    %95 = arith.addf %94, %6 : vector<8x8xf32>
    %cst_27 = arith.constant dense<0xFF800000> : vector<8xf32>
    %96 = vector.multi_reduction <maximumf>, %95, %cst_27 [1] : vector<8x8xf32> to vector<8xf32>
    %97 = vector.shape_cast %96 : vector<8xf32> to vector<8x1xf32>
    %98 = vector.broadcast %97 : vector<8x1xf32> to vector<8x8xf32>
    %99 = arith.subf %95, %98 : vector<8x8xf32>
    %100 = math.exp %99 : vector<8x8xf32>
    %cst_28 = arith.constant dense<0.000000e+00> : vector<8xf32>
    %101 = vector.multi_reduction <add>, %100, %cst_28 [1] : vector<8x8xf32> to vector<8xf32>
    %102 = vector.shape_cast %101 : vector<8xf32> to vector<8x1xf32>
    %103 = tpu.reciprocal %102 {approx = true} : vector<8x1xf32> -> vector<8x1xf32>
    %104 = vector.broadcast %103 : vector<8x1xf32> to vector<8x8xf32>
    %105 = arith.mulf %100, %104 : vector<8x8xf32>
    %cst_29 = arith.constant dense<0.000000e+00> : vector<8x8xf32>
    %106 = tpu.matmul %105, %93, %cst_29 {dimension_numbers = #tpu.dot_dimension_numbers<[1], [0], [0], [1], [0, 0, 1, 1], [], []>} : vector<8x8xf32>, vector<8x8xf32>, vector<8x8xf32> -> vector<8x8xf32>
    %107 = tpu.concatenate %58, %74, %90, %106 in 1 : vector<8x8xf32>, vector<8x8xf32>, vector<8x8xf32>, vector<8x8xf32> -> vector<8x32xf32>
    %108 = arith.truncf %107 : vector<8x32xf32> to vector<8x32xbf16>
    %c0_30 = arith.constant 0 : index
    %c0_31 = arith.constant 0 : index
    %c0_32 = arith.constant 0 : index
    %109 = vector.load %arg2[%c0_30, %c0_31, %c0_32] : memref<2x32x32xbf16, #tpu.memory_space<vmem>>, vector<1x32x32xbf16>
    %110 = vector.shape_cast %109 : vector<1x32x32xbf16> to vector<32x32xbf16>
    %cst_33 = arith.constant dense<0.000000e+00> : vector<8x32xf32>
    %111 = tpu.matmul %108, %110, %cst_33 {dimension_numbers = #tpu.dot_dimension_numbers<[1], [0], [0], [1], [0, 0, 1, 1], [], []>} : vector<8x32xbf16>, vector<32x32xbf16>, vector<8x32xf32> -> vector<8x32xf32>
    %112 = vector.broadcast %12 : vector<1x32xf32> to vector<8x32xf32>
    %113 = arith.addf %111, %112 : vector<8x32xf32>
    %114 = arith.addf %0, %113 : vector<8x32xf32>
    %cst_34 = arith.constant dense<0.000000e+00> : vector<8xf32>
    %115 = vector.multi_reduction <add>, %114, %cst_34 [1] : vector<8x32xf32> to vector<8xf32>
    %116 = vector.shape_cast %115 : vector<8xf32> to vector<8x1xf32>
    %cst_35 = arith.constant 3.200000e+01 : f32
    %117 = vector.broadcast %cst_35 : f32 to vector<8x1xf32>
    %118 = arith.divf %116, %117 : vector<8x1xf32>
    %119 = vector.broadcast %118 : vector<8x1xf32> to vector<8x32xf32>
    %120 = arith.subf %114, %119 : vector<8x32xf32>
    %121 = arith.mulf %120, %120 : vector<8x32xf32>
    %cst_36 = arith.constant dense<0.000000e+00> : vector<8xf32>
    %122 = vector.multi_reduction <add>, %121, %cst_36 [1] : vector<8x32xf32> to vector<8xf32>
    %123 = vector.shape_cast %122 : vector<8xf32> to vector<8x1xf32>
    %cst_37 = arith.constant 3.200000e+01 : f32
    %124 = vector.broadcast %cst_37 : f32 to vector<8x1xf32>
    %125 = arith.divf %123, %124 : vector<8x1xf32>
    %cst_38 = arith.constant 9.99999974E-6 : f32
    %126 = vector.broadcast %cst_38 : f32 to vector<8x1xf32>
    %127 = arith.addf %125, %126 : vector<8x1xf32>
    %128 = math.rsqrt %127 : vector<8x1xf32>
    %129 = vector.broadcast %128 : vector<8x1xf32> to vector<8x32xf32>
    %130 = arith.mulf %120, %129 : vector<8x32xf32>
    %131 = vector.broadcast %13 : vector<1x32xf32> to vector<8x32xf32>
    %132 = arith.mulf %130, %131 : vector<8x32xf32>
    %133 = vector.broadcast %14 : vector<1x32xf32> to vector<8x32xf32>
    %134 = arith.addf %132, %133 : vector<8x32xf32>
    %135 = arith.truncf %134 : vector<8x32xf32> to vector<8x32xbf16>
    %c0_39 = arith.constant 0 : index
    %c0_40 = arith.constant 0 : index
    %c0_41 = arith.constant 0 : index
    %136 = vector.load %arg3[%c0_39, %c0_40, %c0_41] : memref<2x32x128xbf16, #tpu.memory_space<vmem>>, vector<1x32x128xbf16>
    %137 = vector.shape_cast %136 : vector<1x32x128xbf16> to vector<32x128xbf16>
    %cst_42 = arith.constant dense<0.000000e+00> : vector<8x128xf32>
    %138 = tpu.matmul %135, %137, %cst_42 {dimension_numbers = #tpu.dot_dimension_numbers<[1], [0], [0], [1], [0, 0, 1, 1], [], []>} : vector<8x32xbf16>, vector<32x128xbf16>, vector<8x128xf32> -> vector<8x128xf32>
    %139 = vector.broadcast %15 : vector<1x128xf32> to vector<8x128xf32>
    %140 = arith.addf %138, %139 : vector<8x128xf32>
    %cst_43 = arith.constant 5.000000e-01 : f32
    %141 = vector.broadcast %cst_43 : f32 to vector<8x128xf32>
    %142 = arith.mulf %141, %140 : vector<8x128xf32>
    %cst_44 = arith.constant 4.471500e-02 : f32
    %143 = vector.broadcast %cst_44 : f32 to vector<8x128xf32>
    %144 = arith.mulf %143, %140 : vector<8x128xf32>
    %145 = arith.mulf %144, %140 : vector<8x128xf32>
    %146 = arith.mulf %145, %140 : vector<8x128xf32>
    %147 = arith.addf %140, %146 : vector<8x128xf32>
    %cst_45 = arith.constant 0.797884583 : f32
    %148 = vector.broadcast %cst_45 : f32 to vector<8x128xf32>
    %149 = arith.mulf %148, %147 : vector<8x128xf32>
    %150 = math.tanh %149 : vector<8x128xf32>
    %cst_46 = arith.constant 1.000000e+00 : f32
    %151 = vector.broadcast %cst_46 : f32 to vector<8x128xf32>
    %152 = arith.addf %151, %150 : vector<8x128xf32>
    %153 = arith.mulf %142, %152 : vector<8x128xf32>
    %154 = arith.truncf %153 : vector<8x128xf32> to vector<8x128xbf16>
    %c0_47 = arith.constant 0 : index
    %c0_48 = arith.constant 0 : index
    %c0_49 = arith.constant 0 : index
    %155 = vector.load %arg4[%c0_47, %c0_48, %c0_49] : memref<2x128x32xbf16, #tpu.memory_space<vmem>>, vector<1x128x32xbf16>
    %156 = vector.shape_cast %155 : vector<1x128x32xbf16> to vector<128x32xbf16>
    %cst_50 = arith.constant dense<0.000000e+00> : vector<8x32xf32>
    %157 = tpu.matmul %154, %156, %cst_50 {dimension_numbers = #tpu.dot_dimension_numbers<[1], [0], [0], [1], [0, 0, 1, 1], [], []>} : vector<8x128xbf16>, vector<128x32xbf16>, vector<8x32xf32> -> vector<8x32xf32>
    %158 = vector.broadcast %16 : vector<1x32xf32> to vector<8x32xf32>
    %159 = arith.addf %157, %158 : vector<8x32xf32>
    %160 = arith.addf %114, %159 : vector<8x32xf32>
    %c1 = arith.constant 1 : index
    %c0_51 = arith.constant 0 : index
    %c0_52 = arith.constant 0 : index
    %161 = vector.load %arg5[%c1, %c0_51, %c0_52] : memref<2x8x128xf32, #tpu.memory_space<vmem>>, vector<1x8x128xf32>
    %162 = vector.shape_cast %161 : vector<1x8x128xf32> to vector<8x128xf32>
    %163 = vector.extract_strided_slice %162 {offsets = [0, 0], sizes = [1, 32], strides = [1, 1]} : vector<8x128xf32> to vector<1x32xf32>
    %164 = vector.extract_strided_slice %162 {offsets = [1, 0], sizes = [1, 32], strides = [1, 1]} : vector<8x128xf32> to vector<1x32xf32>
    %165 = vector.extract_strided_slice %162 {offsets = [2, 0], sizes = [1, 96], strides = [1, 1]} : vector<8x128xf32> to vector<1x96xf32>
    %166 = vector.extract_strided_slice %162 {offsets = [3, 0], sizes = [1, 32], strides = [1, 1]} : vector<8x128xf32> to vector<1x32xf32>
    %167 = vector.extract_strided_slice %162 {offsets = [4, 0], sizes = [1, 32], strides = [1, 1]} : vector<8x128xf32> to vector<1x32xf32>
    %168 = vector.extract_strided_slice %162 {offsets = [5, 0], sizes = [1, 32], strides = [1, 1]} : vector<8x128xf32> to vector<1x32xf32>
    %169 = vector.extract_strided_slice %162 {offsets = [6, 0], sizes = [1, 128], strides = [1, 1]} : vector<8x128xf32> to vector<1x128xf32>
    %170 = vector.extract_strided_slice %162 {offsets = [7, 0], sizes = [1, 32], strides = [1, 1]} : vector<8x128xf32> to vector<1x32xf32>
    %cst_53 = arith.constant dense<0.000000e+00> : vector<8xf32>
    %171 = vector.multi_reduction <add>, %160, %cst_53 [1] : vector<8x32xf32> to vector<8xf32>
    %172 = vector.shape_cast %171 : vector<8xf32> to vector<8x1xf32>
    %cst_54 = arith.constant 3.200000e+01 : f32
    %173 = vector.broadcast %cst_54 : f32 to vector<8x1xf32>
    %174 = arith.divf %172, %173 : vector<8x1xf32>
    %175 = vector.broadcast %174 : vector<8x1xf32> to vector<8x32xf32>
    %176 = arith.subf %160, %175 : vector<8x32xf32>
    %177 = arith.mulf %176, %176 : vector<8x32xf32>
    %cst_55 = arith.constant dense<0.000000e+00> : vector<8xf32>
    %178 = vector.multi_reduction <add>, %177, %cst_55 [1] : vector<8x32xf32> to vector<8xf32>
    %179 = vector.shape_cast %178 : vector<8xf32> to vector<8x1xf32>
    %cst_56 = arith.constant 3.200000e+01 : f32
    %180 = vector.broadcast %cst_56 : f32 to vector<8x1xf32>
    %181 = arith.divf %179, %180 : vector<8x1xf32>
    %cst_57 = arith.constant 9.99999974E-6 : f32
    %182 = vector.broadcast %cst_57 : f32 to vector<8x1xf32>
    %183 = arith.addf %181, %182 : vector<8x1xf32>
    %184 = math.rsqrt %183 : vector<8x1xf32>
    %185 = vector.broadcast %184 : vector<8x1xf32> to vector<8x32xf32>
    %186 = arith.mulf %176, %185 : vector<8x32xf32>
    %187 = vector.broadcast %163 : vector<1x32xf32> to vector<8x32xf32>
    %188 = arith.mulf %186, %187 : vector<8x32xf32>
    %189 = vector.broadcast %164 : vector<1x32xf32> to vector<8x32xf32>
    %190 = arith.addf %188, %189 : vector<8x32xf32>
    %191 = arith.truncf %190 : vector<8x32xf32> to vector<8x32xbf16>
    %c1_58 = arith.constant 1 : index
    %c0_59 = arith.constant 0 : index
    %c0_60 = arith.constant 0 : index
    %192 = vector.load %arg1[%c1_58, %c0_59, %c0_60] : memref<2x32x96xbf16, #tpu.memory_space<vmem>>, vector<1x32x96xbf16>
    %193 = vector.shape_cast %192 : vector<1x32x96xbf16> to vector<32x96xbf16>
    %cst_61 = arith.constant dense<0.000000e+00> : vector<8x96xf32>
    %194 = tpu.matmul %191, %193, %cst_61 {dimension_numbers = #tpu.dot_dimension_numbers<[1], [0], [0], [1], [0, 0, 1, 1], [], []>} : vector<8x32xbf16>, vector<32x96xbf16>, vector<8x96xf32> -> vector<8x96xf32>
    %195 = vector.broadcast %165 : vector<1x96xf32> to vector<8x96xf32>
    %196 = arith.addf %194, %195 : vector<8x96xf32>
    %197 = vector.extract_strided_slice %196 {offsets = [0, 0], sizes = [8, 8], strides = [1, 1]} : vector<8x96xf32> to vector<8x8xf32>
    %198 = vector.extract_strided_slice %196 {offsets = [0, 32], sizes = [8, 8], strides = [1, 1]} : vector<8x96xf32> to vector<8x8xf32>
    %199 = vector.extract_strided_slice %196 {offsets = [0, 64], sizes = [8, 8], strides = [1, 1]} : vector<8x96xf32> to vector<8x8xf32>
    %cst_62 = arith.constant dense<0.000000e+00> : vector<8x8xf32>
    %200 = tpu.matmul %197, %198, %cst_62 {dimension_numbers = #tpu.dot_dimension_numbers<[1], [1], [0], [0], [0, 0, 1, 0], [], []>} : vector<8x8xf32>, vector<8x8xf32>, vector<8x8xf32> -> vector<8x8xf32>
    %201 = arith.addf %200, %6 : vector<8x8xf32>
    %cst_63 = arith.constant dense<0xFF800000> : vector<8xf32>
    %202 = vector.multi_reduction <maximumf>, %201, %cst_63 [1] : vector<8x8xf32> to vector<8xf32>
    %203 = vector.shape_cast %202 : vector<8xf32> to vector<8x1xf32>
    %204 = vector.broadcast %203 : vector<8x1xf32> to vector<8x8xf32>
    %205 = arith.subf %201, %204 : vector<8x8xf32>
    %206 = math.exp %205 : vector<8x8xf32>
    %cst_64 = arith.constant dense<0.000000e+00> : vector<8xf32>
    %207 = vector.multi_reduction <add>, %206, %cst_64 [1] : vector<8x8xf32> to vector<8xf32>
    %208 = vector.shape_cast %207 : vector<8xf32> to vector<8x1xf32>
    %209 = tpu.reciprocal %208 {approx = true} : vector<8x1xf32> -> vector<8x1xf32>
    %210 = vector.broadcast %209 : vector<8x1xf32> to vector<8x8xf32>
    %211 = arith.mulf %206, %210 : vector<8x8xf32>
    %cst_65 = arith.constant dense<0.000000e+00> : vector<8x8xf32>
    %212 = tpu.matmul %211, %199, %cst_65 {dimension_numbers = #tpu.dot_dimension_numbers<[1], [0], [0], [1], [0, 0, 1, 1], [], []>} : vector<8x8xf32>, vector<8x8xf32>, vector<8x8xf32> -> vector<8x8xf32>
    %213 = vector.extract_strided_slice %196 {offsets = [0, 8], sizes = [8, 8], strides = [1, 1]} : vector<8x96xf32> to vector<8x8xf32>
    %214 = vector.extract_strided_slice %196 {offsets = [0, 40], sizes = [8, 8], strides = [1, 1]} : vector<8x96xf32> to vector<8x8xf32>
    %215 = vector.extract_strided_slice %196 {offsets = [0, 72], sizes = [8, 8], strides = [1, 1]} : vector<8x96xf32> to vector<8x8xf32>
    %cst_66 = arith.constant dense<0.000000e+00> : vector<8x8xf32>
    %216 = tpu.matmul %213, %214, %cst_66 {dimension_numbers = #tpu.dot_dimension_numbers<[1], [1], [0], [0], [0, 0, 1, 0], [], []>} : vector<8x8xf32>, vector<8x8xf32>, vector<8x8xf32> -> vector<8x8xf32>
    %217 = arith.addf %216, %6 : vector<8x8xf32>
    %cst_67 = arith.constant dense<0xFF800000> : vector<8xf32>
    %218 = vector.multi_reduction <maximumf>, %217, %cst_67 [1] : vector<8x8xf32> to vector<8xf32>
    %219 = vector.shape_cast %218 : vector<8xf32> to vector<8x1xf32>
    %220 = vector.broadcast %219 : vector<8x1xf32> to vector<8x8xf32>
    %221 = arith.subf %217, %220 : vector<8x8xf32>
    %222 = math.exp %221 : vector<8x8xf32>
    %cst_68 = arith.constant dense<0.000000e+00> : vector<8xf32>
    %223 = vector.multi_reduction <add>, %222, %cst_68 [1] : vector<8x8xf32> to vector<8xf32>
    %224 = vector.shape_cast %223 : vector<8xf32> to vector<8x1xf32>
    %225 = tpu.reciprocal %224 {approx = true} : vector<8x1xf32> -> vector<8x1xf32>
    %226 = vector.broadcast %225 : vector<8x1xf32> to vector<8x8xf32>
    %227 = arith.mulf %222, %226 : vector<8x8xf32>
    %cst_69 = arith.constant dense<0.000000e+00> : vector<8x8xf32>
    %228 = tpu.matmul %227, %215, %cst_69 {dimension_numbers = #tpu.dot_dimension_numbers<[1], [0], [0], [1], [0, 0, 1, 1], [], []>} : vector<8x8xf32>, vector<8x8xf32>, vector<8x8xf32> -> vector<8x8xf32>
    %229 = vector.extract_strided_slice %196 {offsets = [0, 16], sizes = [8, 8], strides = [1, 1]} : vector<8x96xf32> to vector<8x8xf32>
    %230 = vector.extract_strided_slice %196 {offsets = [0, 48], sizes = [8, 8], strides = [1, 1]} : vector<8x96xf32> to vector<8x8xf32>
    %231 = vector.extract_strided_slice %196 {offsets = [0, 80], sizes = [8, 8], strides = [1, 1]} : vector<8x96xf32> to vector<8x8xf32>
    %cst_70 = arith.constant dense<0.000000e+00> : vector<8x8xf32>
    %232 = tpu.matmul %229, %230, %cst_70 {dimension_numbers = #tpu.dot_dimension_numbers<[1], [1], [0], [0], [0, 0, 1, 0], [], []>} : vector<8x8xf32>, vector<8x8xf32>, vector<8x8xf32> -> vector<8x8xf32>
    %233 = arith.addf %232, %6 : vector<8x8xf32>
    %cst_71 = arith.constant dense<0xFF800000> : vector<8xf32>
    %234 = vector.multi_reduction <maximumf>, %233, %cst_71 [1] : vector<8x8xf32> to vector<8xf32>
    %235 = vector.shape_cast %234 : vector<8xf32> to vector<8x1xf32>
    %236 = vector.broadcast %235 : vector<8x1xf32> to vector<8x8xf32>
    %237 = arith.subf %233, %236 : vector<8x8xf32>
    %238 = math.exp %237 : vector<8x8xf32>
    %cst_72 = arith.constant dense<0.000000e+00> : vector<8xf32>
    %239 = vector.multi_reduction <add>, %238, %cst_72 [1] : vector<8x8xf32> to vector<8xf32>
    %240 = vector.shape_cast %239 : vector<8xf32> to vector<8x1xf32>
    %241 = tpu.reciprocal %240 {approx = true} : vector<8x1xf32> -> vector<8x1xf32>
    %242 = vector.broadcast %241 : vector<8x1xf32> to vector<8x8xf32>
    %243 = arith.mulf %238, %242 : vector<8x8xf32>
    %cst_73 = arith.constant dense<0.000000e+00> : vector<8x8xf32>
    %244 = tpu.matmul %243, %231, %cst_73 {dimension_numbers = #tpu.dot_dimension_numbers<[1], [0], [0], [1], [0, 0, 1, 1], [], []>} : vector<8x8xf32>, vector<8x8xf32>, vector<8x8xf32> -> vector<8x8xf32>
    %245 = vector.extract_strided_slice %196 {offsets = [0, 24], sizes = [8, 8], strides = [1, 1]} : vector<8x96xf32> to vector<8x8xf32>
    %246 = vector.extract_strided_slice %196 {offsets = [0, 56], sizes = [8, 8], strides = [1, 1]} : vector<8x96xf32> to vector<8x8xf32>
    %247 = vector.extract_strided_slice %196 {offsets = [0, 88], sizes = [8, 8], strides = [1, 1]} : vector<8x96xf32> to vector<8x8xf32>
    %cst_74 = arith.constant dense<0.000000e+00> : vector<8x8xf32>
    %248 = tpu.matmul %245, %246, %cst_74 {dimension_numbers = #tpu.dot_dimension_numbers<[1], [1], [0], [0], [0, 0, 1, 0], [], []>} : vector<8x8xf32>, vector<8x8xf32>, vector<8x8xf32> -> vector<8x8xf32>
    %249 = arith.addf %248, %6 : vector<8x8xf32>
    %cst_75 = arith.constant dense<0xFF800000> : vector<8xf32>
    %250 = vector.multi_reduction <maximumf>, %249, %cst_75 [1] : vector<8x8xf32> to vector<8xf32>
    %251 = vector.shape_cast %250 : vector<8xf32> to vector<8x1xf32>
    %252 = vector.broadcast %251 : vector<8x1xf32> to vector<8x8xf32>
    %253 = arith.subf %249, %252 : vector<8x8xf32>
    %254 = math.exp %253 : vector<8x8xf32>
    %cst_76 = arith.constant dense<0.000000e+00> : vector<8xf32>
    %255 = vector.multi_reduction <add>, %254, %cst_76 [1] : vector<8x8xf32> to vector<8xf32>
    %256 = vector.shape_cast %255 : vector<8xf32> to vector<8x1xf32>
    %257 = tpu.reciprocal %256 {approx = true} : vector<8x1xf32> -> vector<8x1xf32>
    %258 = vector.broadcast %257 : vector<8x1xf32> to vector<8x8xf32>
    %259 = arith.mulf %254, %258 : vector<8x8xf32>
    %cst_77 = arith.constant dense<0.000000e+00> : vector<8x8xf32>
    %260 = tpu.matmul %259, %247, %cst_77 {dimension_numbers = #tpu.dot_dimension_numbers<[1], [0], [0], [1], [0, 0, 1, 1], [], []>} : vector<8x8xf32>, vector<8x8xf32>, vector<8x8xf32> -> vector<8x8xf32>
    %261 = tpu.concatenate %212, %228, %244, %260 in 1 : vector<8x8xf32>, vector<8x8xf32>, vector<8x8xf32>, vector<8x8xf32> -> vector<8x32xf32>
    %262 = arith.truncf %261 : vector<8x32xf32> to vector<8x32xbf16>
    %c1_78 = arith.constant 1 : index
    %c0_79 = arith.constant 0 : index
    %c0_80 = arith.constant 0 : index
    %263 = vector.load %arg2[%c1_78, %c0_79, %c0_80] : memref<2x32x32xbf16, #tpu.memory_space<vmem>>, vector<1x32x32xbf16>
    %264 = vector.shape_cast %263 : vector<1x32x32xbf16> to vector<32x32xbf16>
    %cst_81 = arith.constant dense<0.000000e+00> : vector<8x32xf32>
    %265 = tpu.matmul %262, %264, %cst_81 {dimension_numbers = #tpu.dot_dimension_numbers<[1], [0], [0], [1], [0, 0, 1, 1], [], []>} : vector<8x32xbf16>, vector<32x32xbf16>, vector<8x32xf32> -> vector<8x32xf32>
    %266 = vector.broadcast %166 : vector<1x32xf32> to vector<8x32xf32>
    %267 = arith.addf %265, %266 : vector<8x32xf32>
    %268 = arith.addf %160, %267 : vector<8x32xf32>
    %cst_82 = arith.constant dense<0.000000e+00> : vector<8xf32>
    %269 = vector.multi_reduction <add>, %268, %cst_82 [1] : vector<8x32xf32> to vector<8xf32>
    %270 = vector.shape_cast %269 : vector<8xf32> to vector<8x1xf32>
    %cst_83 = arith.constant 3.200000e+01 : f32
    %271 = vector.broadcast %cst_83 : f32 to vector<8x1xf32>
    %272 = arith.divf %270, %271 : vector<8x1xf32>
    %273 = vector.broadcast %272 : vector<8x1xf32> to vector<8x32xf32>
    %274 = arith.subf %268, %273 : vector<8x32xf32>
    %275 = arith.mulf %274, %274 : vector<8x32xf32>
    %cst_84 = arith.constant dense<0.000000e+00> : vector<8xf32>
    %276 = vector.multi_reduction <add>, %275, %cst_84 [1] : vector<8x32xf32> to vector<8xf32>
    %277 = vector.shape_cast %276 : vector<8xf32> to vector<8x1xf32>
    %cst_85 = arith.constant 3.200000e+01 : f32
    %278 = vector.broadcast %cst_85 : f32 to vector<8x1xf32>
    %279 = arith.divf %277, %278 : vector<8x1xf32>
    %cst_86 = arith.constant 9.99999974E-6 : f32
    %280 = vector.broadcast %cst_86 : f32 to vector<8x1xf32>
    %281 = arith.addf %279, %280 : vector<8x1xf32>
    %282 = math.rsqrt %281 : vector<8x1xf32>
    %283 = vector.broadcast %282 : vector<8x1xf32> to vector<8x32xf32>
    %284 = arith.mulf %274, %283 : vector<8x32xf32>
    %285 = vector.broadcast %167 : vector<1x32xf32> to vector<8x32xf32>
    %286 = arith.mulf %284, %285 : vector<8x32xf32>
    %287 = vector.broadcast %168 : vector<1x32xf32> to vector<8x32xf32>
    %288 = arith.addf %286, %287 : vector<8x32xf32>
    %289 = arith.truncf %288 : vector<8x32xf32> to vector<8x32xbf16>
    %c1_87 = arith.constant 1 : index
    %c0_88 = arith.constant 0 : index
    %c0_89 = arith.constant 0 : index
    %290 = vector.load %arg3[%c1_87, %c0_88, %c0_89] : memref<2x32x128xbf16, #tpu.memory_space<vmem>>, vector<1x32x128xbf16>
    %291 = vector.shape_cast %290 : vector<1x32x128xbf16> to vector<32x128xbf16>
    %cst_90 = arith.constant dense<0.000000e+00> : vector<8x128xf32>
    %292 = tpu.matmul %289, %291, %cst_90 {dimension_numbers = #tpu.dot_dimension_numbers<[1], [0], [0], [1], [0, 0, 1, 1], [], []>} : vector<8x32xbf16>, vector<32x128xbf16>, vector<8x128xf32> -> vector<8x128xf32>
    %293 = vector.broadcast %169 : vector<1x128xf32> to vector<8x128xf32>
    %294 = arith.addf %292, %293 : vector<8x128xf32>
    %cst_91 = arith.constant 5.000000e-01 : f32
    %295 = vector.broadcast %cst_91 : f32 to vector<8x128xf32>
    %296 = arith.mulf %295, %294 : vector<8x128xf32>
    %cst_92 = arith.constant 4.471500e-02 : f32
    %297 = vector.broadcast %cst_92 : f32 to vector<8x128xf32>
    %298 = arith.mulf %297, %294 : vector<8x128xf32>
    %299 = arith.mulf %298, %294 : vector<8x128xf32>
    %300 = arith.mulf %299, %294 : vector<8x128xf32>
    %301 = arith.addf %294, %300 : vector<8x128xf32>
    %cst_93 = arith.constant 0.797884583 : f32
    %302 = vector.broadcast %cst_93 : f32 to vector<8x128xf32>
    %303 = arith.mulf %302, %301 : vector<8x128xf32>
    %304 = math.tanh %303 : vector<8x128xf32>
    %cst_94 = arith.constant 1.000000e+00 : f32
    %305 = vector.broadcast %cst_94 : f32 to vector<8x128xf32>
    %306 = arith.addf %305, %304 : vector<8x128xf32>
    %307 = arith.mulf %296, %306 : vector<8x128xf32>
    %308 = arith.truncf %307 : vector<8x128xf32> to vector<8x128xbf16>
    %c1_95 = arith.constant 1 : index
    %c0_96 = arith.constant 0 : index
    %c0_97 = arith.constant 0 : index
    %309 = vector.load %arg4[%c1_95, %c0_96, %c0_97] : memref<2x128x32xbf16, #tpu.memory_space<vmem>>, vector<1x128x32xbf16>
    %310 = vector.shape_cast %309 : vector<1x128x32xbf16> to vector<128x32xbf16>
    %cst_98 = arith.constant dense<0.000000e+00> : vector<8x32xf32>
    %311 = tpu.matmul %308, %310, %cst_98 {dimension_numbers = #tpu.dot_dimension_numbers<[1], [0], [0], [1], [0, 0, 1, 1], [], []>} : vector<8x128xbf16>, vector<128x32xbf16>, vector<8x32xf32> -> vector<8x32xf32>
    %312 = vector.broadcast %170 : vector<1x32xf32> to vector<8x32xf32>
    %313 = arith.addf %311, %312 : vector<8x32xf32>
    %314 = arith.addf %268, %313 : vector<8x32xf32>
    %c0_99 = arith.constant 0 : index
    %c0_100 = arith.constant 0 : index
    %315 = vector.load %arg6[%c0_99, %c0_100] : memref<2x32xf32, #tpu.memory_space<vmem>>, vector<1x32xf32>
    %c1_101 = arith.constant 1 : index
    %c0_102 = arith.constant 0 : index
    %316 = vector.load %arg6[%c1_101, %c0_102] : memref<2x32xf32, #tpu.memory_space<vmem>>, vector<1x32xf32>
    %cst_103 = arith.constant dense<0.000000e+00> : vector<8xf32>
    %317 = vector.multi_reduction <add>, %314, %cst_103 [1] : vector<8x32xf32> to vector<8xf32>
    %318 = vector.shape_cast %317 : vector<8xf32> to vector<8x1xf32>
    %cst_104 = arith.constant 3.200000e+01 : f32
    %319 = vector.broadcast %cst_104 : f32 to vector<8x1xf32>
    %320 = arith.divf %318, %319 : vector<8x1xf32>
    %321 = vector.broadcast %320 : vector<8x1xf32> to vector<8x32xf32>
    %322 = arith.subf %314, %321 : vector<8x32xf32>
    %323 = arith.mulf %322, %322 : vector<8x32xf32>
    %cst_105 = arith.constant dense<0.000000e+00> : vector<8xf32>
    %324 = vector.multi_reduction <add>, %323, %cst_105 [1] : vector<8x32xf32> to vector<8xf32>
    %325 = vector.shape_cast %324 : vector<8xf32> to vector<8x1xf32>
    %cst_106 = arith.constant 3.200000e+01 : f32
    %326 = vector.broadcast %cst_106 : f32 to vector<8x1xf32>
    %327 = arith.divf %325, %326 : vector<8x1xf32>
    %cst_107 = arith.constant 9.99999974E-6 : f32
    %328 = vector.broadcast %cst_107 : f32 to vector<8x1xf32>
    %329 = arith.addf %327, %328 : vector<8x1xf32>
    %330 = math.rsqrt %329 : vector<8x1xf32>
    %331 = vector.broadcast %330 : vector<8x1xf32> to vector<8x32xf32>
    %332 = arith.mulf %322, %331 : vector<8x32xf32>
    %333 = vector.broadcast %315 : vector<1x32xf32> to vector<8x32xf32>
    %334 = arith.mulf %332, %333 : vector<8x32xf32>
    %335 = vector.broadcast %316 : vector<1x32xf32> to vector<8x32xf32>
    %336 = arith.addf %334, %335 : vector<8x32xf32>
    %c0_108 = arith.constant 0 : index
    %c0_109 = arith.constant 0 : index
    %337 = vector.load %arg7[%c0_108, %c0_109] : memref<8x32xf32, #tpu.memory_space<vmem>>, vector<8x32xf32>
    tpu.vector_store %arg7[%c0_108, %c0_109], %336 {strides = array<i32>} : memref<8x32xf32, #tpu.memory_space<vmem>>, vector<8x32xf32>,
    return
  }
}

</mosaic_0001>

<llo_original>
// kernel: _forward_jit.1
$region0: #{_forward_jit.1}
  #allocation0 [shape = 'u32[]', space=smem, size = 0x4, offset = 0x4, fixed_abs, tag = 'smem constant byte address 0x4 - core index']
  #allocation1 [shape = 'u32[144,128]{1,0:T(1,128)}', space=vmem, size = 0x12000, scoped, tag = 'internal scratch']
  %s0 = inlined_call_operand.vmem [shape: f32[8,32], index: 0, kind: input, shape index: {}]
  %s1 = inlined_call_operand.vmem [shape: bf16[2,32,96], index: 1, kind: input, shape index: {}]
  %s2 = inlined_call_operand.vmem [shape: bf16[2,32,32], index: 2, kind: input, shape index: {}]
  %s3 = inlined_call_operand.vmem [shape: bf16[2,32,128], index: 3, kind: input, shape index: {}]
  %s4 = inlined_call_operand.vmem [shape: bf16[2,128,32], index: 4, kind: input, shape index: {}]
  %s5 = inlined_call_operand.vmem [shape: f32[2,8,128], index: 5, kind: input, shape index: {}]
  %s6 = inlined_call_operand.vmem [shape: f32[2,32], index: 6, kind: input, shape index: {}]
  %s7 = inlined_call_operand.hbm [shape: f32[8,32], index: 7, kind: output, shape index: {}]
  %s8 = sld [smem:[#allocation0]]
  $region38: #{_forward_jit.1} parent=0
    _
  %s10 = ssub.s32 1, %s8
  %s11 = scalar_select 0, %s10, %s8
  $region1: #{_forward_jit.1} parent=0
    #allocation2 [shape = 'u8[4096]{0}', space=vmem, size = 0x1000, scoped, tag = 'output window, operand 0, single buffered']
    #allocation3 [shape = 's32[1]{0}', space=sflag, size = 0x4, scoped, tag = 'scoped memory for _forward_jit.1']
    %12 = vsyncpa [#allocation3], 0
    // Predicated region
    $region2: #{_forward_jit.1} parent=1 // pred_check
      _
    $region3: #{_forward_jit.1} parent=1 // pred_check_branch
      %14 = sbr.rel (0) target = $region5
    $region4: #{_forward_jit.1} parent=1 // pred_region
      _
    $region5: #{_forward_jit.1} parent=1 // pred_fallthru
      _
    // Predicated region
    $region6: #{_forward_jit.1} parent=1 // pred_check
      _
    $region7: #{_forward_jit.1} parent=1 // pred_check_branch
      %16 = sbr.rel (0) target = $region9
    $region8: #{_forward_jit.1} parent=1 // pred_region
      _
    $region9: #{_forward_jit.1} parent=1 // pred_fallthru
      _
    // Predicated region
    $region10: #{_forward_jit.1} parent=1 // pred_check
      _
    $region11: #{_forward_jit.1} parent=1 // pred_check_branch
      %18 = sbr.rel (0) target = $region13
    $region12: #{_forward_jit.1} parent=1 // pred_region
      _
    $region13: #{_forward_jit.1} parent=1 // pred_fallthru
      _
    // Predicated region
    $region14: #{_forward_jit.1} parent=1 // pred_check
      _
    $region15: #{_forward_jit.1} parent=1 // pred_check_branch
      %20 = sbr.rel (0) target = $region17
    $region16: #{_forward_jit.1} parent=1 // pred_region
      _
    $region17: #{_forward_jit.1} parent=1 // pred_fallthru
      _
    // Predicated region
    $region18: #{_forward_jit.1} parent=1 // pred_check
      _
    $region19: #{_forward_jit.1} parent=1 // pred_check_branch
      %22 = sbr.rel (0) target = $region21
    $region20: #{_forward_jit.1} parent=1 // pred_region
      _
    $region21: #{_forward_jit.1} parent=1 // pred_fallthru
      _
    // Predicated region
    $region22: #{_forward_jit.1} parent=1 // pred_check
      _
    $region23: #{_forward_jit.1} parent=1 // pred_check_branch
      %24 = sbr.rel (0) target = $region25
    $region24: #{_forward_jit.1} parent=1 // pred_region
      _
    $region25: #{_forward_jit.1} parent=1 // pred_fallthru
      _
    // Predicated region
    $region26: #{_forward_jit.1} parent=1 // pred_check
      _
    $region27: #{_forward_jit.1} parent=1 // pred_check_branch
      %26 = sbr.rel (0) target = $region29
    $region28: #{_forward_jit.1} parent=1 // pred_region
      _
    $region29: #{_forward_jit.1} parent=1 // pred_fallthru
      _
    %v28 = vld [vmem:[%s0] sm:$0xff]
    %v29 = vlaneseq
    %v30 = vshrl.u32 %v29, 7
    %v31 = vlaneseq
    %v32 = vand.u32 %v31, 127
    %vm33 = vcmp.le.s32.totalorder %v32, %v30
    %v34 = vsel %vm33, 0.0, -1e+30
    %v35 = vld [vmem:[%s5] sm:$0xff]
    %vm36 = vcmask 261120
    %v37 = vsel %vm36, %v28, 0.0
    %38 = vadd.xlane.f32.xlu0 %v37
    %v39 = vpop.xlane.xlu0 %38
    %v40 = vrcp.pop 32.0
    %v41 = vmul.f32 %v39, %v40
    %v42 = vsub.f32 %v28, %v41
    %v43 = vmul.f32 %v42, %v42
    %v44 = vsel %vm36, %v43, 0.0
    %45 = vadd.xlane.f32.xlu0 %v44
    %v46 = vpop.xlane.xlu0 %45
    %v47 = vmul.f32 %v46, %v40
    %v48 = vadd.f32 %v47, 1e-05
    %v49 = vrsqrt.pop %v48
    %v50 = vmul.f32 %v42, %v49
    %v51 = vlaneseq
    %v52 = vshrl.u32 %v51, 7
    %v53 = vsub.s32 0, %v52
    %v54 = vrot.slane %v35, %v53
    %v55 = vmul.f32 %v50, %v54
    %v56 = vlaneseq
    %v57 = vshrl.u32 %v56, 7
    %v58 = vsub.s32 1, %v57
    %v59 = vrot.slane %v35, %v58
    %v60 = vadd.f32 %v55, %v59
    %v61 = vpack.c.bf16 %v60, %v60
    %v62 = vld [vmem:[%s1] sm:$0xf]
    %v63 = vld [vmem:[%s1 + $0x4] sm:$0xf]
    %v64 = vld [vmem:[%s1 + $0x8] sm:$0xf]
    %v65 = vld [vmem:[%s1 + $0xc] sm:$0xf]
    %v66 = vlaneseq
    %v67 = vshrl.u32 %v66, 7
    %v68 = vsub.s32 2, %v67
    %v69 = vrot.slane %v35, %v68
    %v74 = vunpack.c.l.b16 %v62
    %v75 = vunpack.c.l.b16 %v63
    %v76 = vunpack.c.l.b16 %v64
    %v77 = vunpack.c.l.b16 %v65
    %v78 = vpack.c.b16 %v75, %v74
    %v79 = vpack.c.b16 %v77, %v76
    %v83 = vsel %vm36, %v61, 0
    %85 = vmatprep.subr.bf16.mxu0 0
    %86 = vmatpush1.bf16.msra.mxu0 %v78
    %87 = vmatprep.subr.bf16.mxu0 0
    %88 = vmatpush1.bf16.msra.mxu0 %v79
    %89 = vmatprep.subr.bf16.mxu0 0
    %90 = vmatpush1.bf16.msra.mxu0 0
    %91 = vmatprep.subr.bf16.mxu0 0
    %92 = vmatpush1.bf16.msra.mxu0 0
    %93 = vmatprep.subr.bf16.mxu0 0
    %94 = vmatpush1.bf16.msra.mxu0 0
    %95 = vmatprep.subr.bf16.mxu0 0
    %96 = vmatpush1.bf16.msra.mxu0 0
    %97 = vmatprep.subr.bf16.mxu0 0
    %98 = vmatpush1.bf16.msra.mxu0 0
    %99 = vmatprep.subr.bf16.mxu0 0
    %100 = vmatpush1.bf16.msra.mxu0 0
    %101 = vmatprep.subr.bf16.mxu0 0
    %102 = vmatpush1.bf16.msra.mxu0 0
    %103 = vmatprep.subr.bf16.mxu0 0
    %104 = vmatpush1.bf16.msra.mxu0 0
    %105 = vmatprep.subr.bf16.mxu0 0
    %106 = vmatpush1.bf16.msra.mxu0 0
    %107 = vmatprep.subr.bf16.mxu0 0
    %108 = vmatpush1.bf16.msra.mxu0 0
    %109 = vmatprep.subr.bf16.mxu0 0
    %110 = vmatpush1.bf16.msra.mxu0 0
    %111 = vmatprep.subr.bf16.mxu0 0
    %112 = vmatpush1.bf16.msra.mxu0 0
    %113 = vmatprep.subr.bf16.mxu0 0
    %114 = vmatpush1.bf16.msra.mxu0 0
    %115 = vmatprep.subr.bf16.mxu0 0
    %116 = vmatpush1.bf16.msra.mxu0 0
    %117 = vmatprep.mubr.bf16.mxu0 0
    %118 = vmatmul.mubr.bf16.gmra.mrb[0].mxu0 %v83
    %v119 = vpop.f32.mrb[0].mxu0
    %v120 = vadd.f32 %v69, %v119
    %v121 = vpop.f32.mrb[0].mxu0
    %v122 = vpop.f32.mrb[0].mxu0
    %v123 = vpop.f32.mrb[0].mxu0
    %124 = vdwg.mxu0
    %126 = vrot.lane.b32.xlu0 %v120, 96
    %v127 = vpop.permute.xlu0 %126
    %vm128 = vcmask 64512
    %v129 = vsel %vm128, %v120, 0
    %v131 = vsel %vm128, %v127, 0
    %133 = vmatprep.subr.mxu0 0.0
    %134 = vmatpush1.xpose.msra.mxu0 %v131
    %135 = vmatprep.subr.mxu0 0.0
    %136 = vmatpush1.xpose.msra.mxu0 0.0
    %137 = vmatprep.subr.mxu0 0.0
    %138 = vmatpush1.xpose.msra.mxu0 0.0
    %139 = vmatprep.subr.mxu0 0.0
    %140 = vmatpush1.xpose.msra.mxu0 0.0
    %141 = vmatprep.subr.mxu0 0.0
    %142 = vmatpush1.xpose.msra.mxu0 0.0
    %143 = vmatprep.subr.mxu0 0.0
    %144 = vmatpush1.xpose.msra.mxu0 0.0
    %145 = vmatprep.subr.mxu0 0.0
    %146 = vmatpush1.xpose.msra.mxu0 0.0
    %147 = vmatprep.subr.mxu0 0.0
    %148 = vmatpush1.xpose.msra.mxu0 0.0
    %149 = vmatprep.subr.mxu0 0.0
    %150 = vmatpush1.xpose.msra.mxu0 0.0
    %151 = vmatprep.subr.mxu0 0.0
    %152 = vmatpush1.xpose.msra.mxu0 0.0
    %153 = vmatprep.subr.mxu0 0.0
    %154 = vmatpush1.xpose.msra.mxu0 0.0
    %155 = vmatprep.subr.mxu0 0.0
    %156 = vmatpush1.xpose.msra.mxu0 0.0
    %157 = vmatprep.subr.mxu0 0.0
    %158 = vmatpush1.xpose.msra.mxu0 0.0
    %159 = vmatprep.subr.mxu0 0.0
    %160 = vmatpush1.xpose.msra.mxu0 0.0
    %161 = vmatprep.subr.mxu0 0.0
    %162 = vmatpush1.xpose.msra.mxu0 0.0
    %163 = vmatprep.subr.mxu0 0.0
    %164 = vmatpush1.xpose.msra.mxu0 0.0
    %165 = vmatprep.subr.mxu0 0.0
    %166 = vmatpush1.xpose.msra.mxu0 0.0
    %167 = vmatprep.subr.mxu0 0.0
    %168 = vmatpush1.xpose.msra.mxu0 0.0
    %169 = vmatprep.subr.mxu0 0.0
    %170 = vmatpush1.xpose.msra.mxu0 0.0
    %171 = vmatprep.subr.mxu0 0.0
    %172 = vmatpush1.xpose.msra.mxu0 0.0
    %173 = vmatprep.subr.mxu0 0.0
    %174 = vmatpush1.xpose.msra.mxu0 0.0
    %175 = vmatprep.subr.mxu0 0.0
    %176 = vmatpush1.xpose.msra.mxu0 0.0
    %177 = vmatprep.subr.mxu0 0.0
    %178 = vmatpush1.xpose.msra.mxu0 0.0
    %179 = vmatprep.subr.mxu0 0.0
    %180 = vmatpush1.xpose.msra.mxu0 0.0
    %181 = vmatprep.subr.mxu0 0.0
    %182 = vmatpush1.xpose.msra.mxu0 0.0
    %183 = vmatprep.subr.mxu0 0.0
    %184 = vmatpush1.xpose.msra.mxu0 0.0
    %185 = vmatprep.subr.mxu0 0.0
    %186 = vmatpush1.xpose.msra.mxu0 0.0
    %187 = vmatprep.subr.mxu0 0.0
    %188 = vmatpush1.xpose.msra.mxu0 0.0
    %189 = vmatprep.subr.mxu0 0.0
    %190 = vmatpush1.xpose.msra.mxu0 0.0
    %191 = vmatprep.subr.mxu0 0.0
    %192 = vmatpush1.xpose.msra.mxu0 0.0
    %193 = vmatprep.subr.mxu0 0.0
    %194 = vmatpush1.xpose.msra.mxu0 0.0
    %195 = vmatprep.subr.mxu0 0.0
    %196 = vmatpush1.xpose.msra.mxu0 0.0
    %197 = vmatprep.mubr.f32.mxu0 0.0
    %198 = vmatmul.mubr.f32.gmra.mrb[0].mxu0 %v129
    %v199 = vpop.f32.mrb[0].mxu0
    %v200 = vadd.f32 %v34, %v199
    %v201 = vpop.f32.mrb[0].mxu0
    %202 = vdwg.mxu0
    %v203 = vsel %vm128, %v200, -inf
    %204 = vmax.xlane.f32.xlu0 %v203
    %v205 = vpop.xlane.xlu0 %204
    %v206 = vsub.f32 %v200, %v205
    %v207 = vmul.f32 %v206, 1.442695
    %v208 = vpow.pop %v207
    %v209 = vsel %vm128, %v208, 0.0
    %210 = vadd.xlane.f32.xlu0 %v209
    %v211 = vpop.xlane.xlu0 %210
    %v212 = vrcp.pop %v211
    %v213 = vmul.f32 %v208, %v212
    %214 = vrot.lane.b32.xlu0 %v120, 64
    %v215 = vpop.permute.xlu0 %214
    %v218 = vsel %vm128, %v213, 0
    %220 = vmatprep.subr.mxu0 0.0
    %221 = vmatpush1.msra.mxu0 %v215
    %222 = vmatprep.subr.mxu0 0.0
    %223 = vmatpush1.msra.mxu0 0.0
    %224 = vmatprep.subr.mxu0 0.0
    %225 = vmatpush1.msra.mxu0 0.0
    %226 = vmatprep.subr.mxu0 0.0
    %227 = vmatpush1.msra.mxu0 0.0
    %228 = vmatprep.subr.mxu0 0.0
    %229 = vmatpush1.msra.mxu0 0.0
    %230 = vmatprep.subr.mxu0 0.0
    %231 = vmatpush1.msra.mxu0 0.0
    %232 = vmatprep.subr.mxu0 0.0
    %233 = vmatpush1.msra.mxu0 0.0
    %234 = vmatprep.subr.mxu0 0.0
    %235 = vmatpush1.msra.mxu0 0.0
    %236 = vmatprep.subr.mxu0 0.0
    %237 = vmatpush1.msra.mxu0 0.0
    %238 = vmatprep.subr.mxu0 0.0
    %239 = vmatpush1.msra.mxu0 0.0
    %240 = vmatprep.subr.mxu0 0.0
    %241 = vmatpush1.msra.mxu0 0.0
    %242 = vmatprep.subr.mxu0 0.0
    %243 = vmatpush1.msra.mxu0 0.0
    %244 = vmatprep.subr.mxu0 0.0
    %245 = vmatpush1.msra.mxu0 0.0
    %246 = vmatprep.subr.mxu0 0.0
    %247 = vmatpush1.msra.mxu0 0.0
    %248 = vmatprep.subr.mxu0 0.0
    %249 = vmatpush1.msra.mxu0 0.0
    %250 = vmatprep.subr.mxu0 0.0
    %251 = vmatpush1.msra.mxu0 0.0
    %252 = vmatprep.subr.mxu0 0.0
    %253 = vmatpush1.msra.mxu0 0.0
    %254 = vmatprep.subr.mxu0 0.0
    %255 = vmatpush1.msra.mxu0 0.0
    %256 = vmatprep.subr.mxu0 0.0
    %257 = vmatpush1.msra.mxu0 0.0
    %258 = vmatprep.subr.mxu0 0.0
    %259 = vmatpush1.msra.mxu0 0.0
    %260 = vmatprep.subr.mxu0 0.0
    %261 = vmatpush1.msra.mxu0 0.0
    %262 = vmatprep.subr.mxu0 0.0
    %263 = vmatpush1.msra.mxu0 0.0
    %264 = vmatprep.subr.mxu0 0.0
    %265 = vmatpush1.msra.mxu0 0.0
    %266 = vmatprep.subr.mxu0 0.0
    %267 = vmatpush1.msra.mxu0 0.0
    %268 = vmatprep.subr.mxu0 0.0
    %269 = vmatpush1.msra.mxu0 0.0
    %270 = vmatprep.subr.mxu0 0.0
    %271 = vmatpush1.msra.mxu0 0.0
    %272 = vmatprep.subr.mxu0 0.0
    %273 = vmatpush1.msra.mxu0 0.0
    %274 = vmatprep.subr.mxu0 0.0
    %275 = vmatpush1.msra.mxu0 0.0
    %276 = vmatprep.subr.mxu0 0.0
    %277 = vmatpush1.msra.mxu0 0.0
    %278 = vmatprep.subr.mxu0 0.0
    %279 = vmatpush1.msra.mxu0 0.0
    %280 = vmatprep.subr.mxu0 0.0
    %281 = vmatpush1.msra.mxu0 0.0
    %282 = vmatprep.subr.mxu0 0.0
    %283 = vmatpush1.msra.mxu0 0.0
    %284 = vmatprep.mubr.f32.mxu0 0.0
    %285 = vmatmul.mubr.f32.gmra.mrb[0].mxu0 %v218
    %v286 = vpop.f32.mrb[0].mxu0
    %v287 = vadd.f32 0.0, %v286
    %v288 = vpop.f32.mrb[0].mxu0
    %289 = vdwg.mxu0
    %290 = vrot.lane.b32.xlu0 %v120, 120
    %v291 = vpop.permute.xlu0 %290
    %292 = vrot.lane.b32.xlu0 %v120, 88
    %v293 = vpop.permute.xlu0 %292
    %v294 = vsel %vm128, %v291, 0
    %v296 = vsel %vm128, %v293, 0
    %298 = vmatprep.subr.mxu0 0.0
    %299 = vmatpush1.xpose.msra.mxu0 %v296
    %300 = vmatprep.subr.mxu0 0.0
    %301 = vmatpush1.xpose.msra.mxu0 0.0
    %302 = vmatprep.subr.mxu0 0.0
    %303 = vmatpush1.xpose.msra.mxu0 0.0
    %304 = vmatprep.subr.mxu0 0.0
    %305 = vmatpush1.xpose.msra.mxu0 0.0
    %306 = vmatprep.subr.mxu0 0.0
    %307 = vmatpush1.xpose.msra.mxu0 0.0
    %308 = vmatprep.subr.mxu0 0.0
    %309 = vmatpush1.xpose.msra.mxu0 0.0
    %310 = vmatprep.subr.mxu0 0.0
    %311 = vmatpush1.xpose.msra.mxu0 0.0
    %312 = vmatprep.subr.mxu0 0.0
    %313 = vmatpush1.xpose.msra.mxu0 0.0
    %314 = vmatprep.subr.mxu0 0.0
    %315 = vmatpush1.xpose.msra.mxu0 0.0
    %316 = vmatprep.subr.mxu0 0.0
    %317 = vmatpush1.xpose.msra.mxu0 0.0
    %318 = vmatprep.subr.mxu0 0.0
    %319 = vmatpush1.xpose.msra.mxu0 0.0
    %320 = vmatprep.subr.mxu0 0.0
    %321 = vmatpush1.xpose.msra.mxu0 0.0
    %322 = vmatprep.subr.mxu0 0.0
    %323 = vmatpush1.xpose.msra.mxu0 0.0
    %324 = vmatprep.subr.mxu0 0.0
    %325 = vmatpush1.xpose.msra.mxu0 0.0
    %326 = vmatprep.subr.mxu0 0.0
    %327 = vmatpush1.xpose.msra.mxu0 0.0
    %328 = vmatprep.subr.mxu0 0.0
    %329 = vmatpush1.xpose.msra.mxu0 0.0
    %330 = vmatprep.subr.mxu0 0.0
    %331 = vmatpush1.xpose.msra.mxu0 0.0
    %332 = vmatprep.subr.mxu0 0.0
    %333 = vmatpush1.xpose.msra.mxu0 0.0
    %334 = vmatprep.subr.mxu0 0.0
    %335 = vmatpush1.xpose.msra.mxu0 0.0
    %336 = vmatprep.subr.mxu0 0.0
    %337 = vmatpush1.xpose.msra.mxu0 0.0
    %338 = vmatprep.subr.mxu0 0.0
    %339 = vmatpush1.xpose.msra.mxu0 0.0
    %340 = vmatprep.subr.mxu0 0.0
    %341 = vmatpush1.xpose.msra.mxu0 0.0
    %342 = vmatprep.subr.mxu0 0.0
    %343 = vmatpush1.xpose.msra.mxu0 0.0
    %344 = vmatprep.subr.mxu0 0.0
    %345 = vmatpush1.xpose.msra.mxu0 0.0
    %346 = vmatprep.subr.mxu0 0.0
    %347 = vmatpush1.xpose.msra.mxu0 0.0
    %348 = vmatprep.subr.mxu0 0.0
    %349 = vmatpush1.xpose.msra.mxu0 0.0
    %350 = vmatprep.subr.mxu0 0.0
    %351 = vmatpush1.xpose.msra.mxu0 0.0
    %352 = vmatprep.subr.mxu0 0.0
    %353 = vmatpush1.xpose.msra.mxu0 0.0
    %354 = vmatprep.subr.mxu0 0.0
    %355 = vmatpush1.xpose.msra.mxu0 0.0
    %356 = vmatprep.subr.mxu0 0.0
    %357 = vmatpush1.xpose.msra.mxu0 0.0
    %358 = vmatprep.subr.mxu0 0.0
    %359 = vmatpush1.xpose.msra.mxu0 0.0
    %360 = vmatprep.subr.mxu0 0.0
    %361 = vmatpush1.xpose.msra.mxu0 0.0
    %362 = vmatprep.mubr.f32.mxu0 0.0
    %363 = vmatmul.mubr.f32.gmra.mrb[0].mxu0 %v294
    %v364 = vpop.f32.mrb[0].mxu0
    %v365 = vadd.f32 %v34, %v364
    %v366 = vpop.f32.mrb[0].mxu0
    %367 = vdwg.mxu0
    %v368 = vsel %vm128, %v365, -inf
    %369 = vmax.xlane.f32.xlu0 %v368
    %v370 = vpop.xlane.xlu0 %369
    %v371 = vsub.f32 %v365, %v370
    %v372 = vmul.f32 %v371, 1.442695
    %v373 = vpow.pop %v372
    %v374 = vsel %vm128, %v373, 0.0
    %375 = vadd.xlane.f32.xlu0 %v374
    %v376 = vpop.xlane.xlu0 %375
    %v377 = vrcp.pop %v376
    %v378 = vmul.f32 %v373, %v377
    %379 = vrot.lane.b32.xlu0 %v120, 56
    %v380 = vpop.permute.xlu0 %379
    %v383 = vsel %vm128, %v378, 0
    %385 = vmatprep.subr.mxu0 0.0
    %386 = vmatpush1.msra.mxu0 %v380
    %387 = vmatprep.subr.mxu0 0.0
    %388 = vmatpush1.msra.mxu0 0.0
    %389 = vmatprep.subr.mxu0 0.0
    %390 = vmatpush1.msra.mxu0 0.0
    %391 = vmatprep.subr.mxu0 0.0
    %392 = vmatpush1.msra.mxu0 0.0
    %393 = vmatprep.subr.mxu0 0.0
    %394 = vmatpush1.msra.mxu0 0.0
    %395 = vmatprep.subr.mxu0 0.0
    %396 = vmatpush1.msra.mxu0 0.0
    %397 = vmatprep.subr.mxu0 0.0
    %398 = vmatpush1.msra.mxu0 0.0
    %399 = vmatprep.subr.mxu0 0.0
    %400 = vmatpush1.msra.mxu0 0.0
    %401 = vmatprep.subr.mxu0 0.0
    %402 = vmatpush1.msra.mxu0 0.0
    %403 = vmatprep.subr.mxu0 0.0
    %404 = vmatpush1.msra.mxu0 0.0
    %405 = vmatprep.subr.mxu0 0.0
    %406 = vmatpush1.msra.mxu0 0.0
    %407 = vmatprep.subr.mxu0 0.0
    %408 = vmatpush1.msra.mxu0 0.0
    %409 = vmatprep.subr.mxu0 0.0
    %410 = vmatpush1.msra.mxu0 0.0
    %411 = vmatprep.subr.mxu0 0.0
    %412 = vmatpush1.msra.mxu0 0.0
    %413 = vmatprep.subr.mxu0 0.0
    %414 = vmatpush1.msra.mxu0 0.0
    %415 = vmatprep.subr.mxu0 0.0
    %416 = vmatpush1.msra.mxu0 0.0
    %417 = vmatprep.subr.mxu0 0.0
    %418 = vmatpush1.msra.mxu0 0.0
    %419 = vmatprep.subr.mxu0 0.0
    %420 = vmatpush1.msra.mxu0 0.0
    %421 = vmatprep.subr.mxu0 0.0
    %422 = vmatpush1.msra.mxu0 0.0
    %423 = vmatprep.subr.mxu0 0.0
    %424 = vmatpush1.msra.mxu0 0.0
    %425 = vmatprep.subr.mxu0 0.0
    %426 = vmatpush1.msra.mxu0 0.0
    %427 = vmatprep.subr.mxu0 0.0
    %428 = vmatpush1.msra.mxu0 0.0
    %429 = vmatprep.subr.mxu0 0.0
    %430 = vmatpush1.msra.mxu0 0.0
    %431 = vmatprep.subr.mxu0 0.0
    %432 = vmatpush1.msra.mxu0 0.0
    %433 = vmatprep.subr.mxu0 0.0
    %434 = vmatpush1.msra.mxu0 0.0
    %435 = vmatprep.subr.mxu0 0.0
    %436 = vmatpush1.msra.mxu0 0.0
    %437 = vmatprep.subr.mxu0 0.0
    %438 = vmatpush1.msra.mxu0 0.0
    %439 = vmatprep.subr.mxu0 0.0
    %440 = vmatpush1.msra.mxu0 0.0
    %441 = vmatprep.subr.mxu0 0.0
    %442 = vmatpush1.msra.mxu0 0.0
    %443 = vmatprep.subr.mxu0 0.0
    %444 = vmatpush1.msra.mxu0 0.0
    %445 = vmatprep.subr.mxu0 0.0
    %446 = vmatpush1.msra.mxu0 0.0
    %447 = vmatprep.subr.mxu0 0.0
    %448 = vmatpush1.msra.mxu0 0.0
    %449 = vmatprep.mubr.f32.mxu0 0.0
    %450 = vmatmul.mubr.f32.gmra.mrb[0].mxu0 %v383
    %v451 = vpop.f32.mrb[0].mxu0
    %v452 = vadd.f32 0.0, %v451
    %v453 = vpop.f32.mrb[0].mxu0
    %454 = vdwg.mxu0
    %455 = vrot.lane.b32.xlu0 %v120, 112
    %v456 = vpop.permute.xlu0 %455
    %457 = vrot.lane.b32.xlu0 %v120, 80
    %v458 = vpop.permute.xlu0 %457
    %v459 = vsel %vm128, %v456, 0
    %v461 = vsel %vm128, %v458, 0
    %463 = vmatprep.subr.mxu0 0.0
    %464 = vmatpush1.xpose.msra.mxu0 %v461
    %465 = vmatprep.subr.mxu0 0.0
    %466 = vmatpush1.xpose.msra.mxu0 0.0
    %467 = vmatprep.subr.mxu0 0.0
    %468 = vmatpush1.xpose.msra.mxu0 0.0
    %469 = vmatprep.subr.mxu0 0.0
    %470 = vmatpush1.xpose.msra.mxu0 0.0
    %471 = vmatprep.subr.mxu0 0.0
    %472 = vmatpush1.xpose.msra.mxu0 0.0
    %473 = vmatprep.subr.mxu0 0.0
    %474 = vmatpush1.xpose.msra.mxu0 0.0
    %475 = vmatprep.subr.mxu0 0.0
    %476 = vmatpush1.xpose.msra.mxu0 0.0
    %477 = vmatprep.subr.mxu0 0.0
    %478 = vmatpush1.xpose.msra.mxu0 0.0
    %479 = vmatprep.subr.mxu0 0.0
    %480 = vmatpush1.xpose.msra.mxu0 0.0
    %481 = vmatprep.subr.mxu0 0.0
    %482 = vmatpush1.xpose.msra.mxu0 0.0
    %483 = vmatprep.subr.mxu0 0.0
    %484 = vmatpush1.xpose.msra.mxu0 0.0
    %485 = vmatprep.subr.mxu0 0.0
    %486 = vmatpush1.xpose.msra.mxu0 0.0
    %487 = vmatprep.subr.mxu0 0.0
    %488 = vmatpush1.xpose.msra.mxu0 0.0
    %489 = vmatprep.subr.mxu0 0.0
    %490 = vmatpush1.xpose.msra.mxu0 0.0
    %491 = vmatprep.subr.mxu0 0.0
    %492 = vmatpush1.xpose.msra.mxu0 0.0
    %493 = vmatprep.subr.mxu0 0.0
    %494 = vmatpush1.xpose.msra.mxu0 0.0
    %495 = vmatprep.subr.mxu0 0.0
    %496 = vmatpush1.xpose.msra.mxu0 0.0
    %497 = vmatprep.subr.mxu0 0.0
    %498 = vmatpush1.xpose.msra.mxu0 0.0
    %499 = vmatprep.subr.mxu0 0.0
    %500 = vmatpush1.xpose.msra.mxu0 0.0
    %501 = vmatprep.subr.mxu0 0.0
    %502 = vmatpush1.xpose.msra.mxu0 0.0
    %503 = vmatprep.subr.mxu0 0.0
    %504 = vmatpush1.xpose.msra.mxu0 0.0
    %505 = vmatprep.subr.mxu0 0.0
    %506 = vmatpush1.xpose.msra.mxu0 0.0
    %507 = vmatprep.subr.mxu0 0.0
    %508 = vmatpush1.xpose.msra.mxu0 0.0
    %509 = vmatprep.subr.mxu0 0.0
    %510 = vmatpush1.xpose.msra.mxu0 0.0
    %511 = vmatprep.subr.mxu0 0.0
    %512 = vmatpush1.xpose.msra.mxu0 0.0
    %513 = vmatprep.subr.mxu0 0.0
    %514 = vmatpush1.xpose.msra.mxu0 0.0
    %515 = vmatprep.subr.mxu0 0.0
    %516 = vmatpush1.xpose.msra.mxu0 0.0
    %517 = vmatprep.subr.mxu0 0.0
    %518 = vmatpush1.xpose.msra.mxu0 0.0
    %519 = vmatprep.subr.mxu0 0.0
    %520 = vmatpush1.xpose.msra.mxu0 0.0
    %521 = vmatprep.subr.mxu0 0.0
    %522 = vmatpush1.xpose.msra.mxu0 0.0
    %523 = vmatprep.subr.mxu0 0.0
    %524 = vmatpush1.xpose.msra.mxu0 0.0
    %525 = vmatprep.subr.mxu0 0.0
    %526 = vmatpush1.xpose.msra.mxu0 0.0
    %527 = vmatprep.mubr.f32.mxu0 0.0
    %528 = vmatmul.mubr.f32.gmra.mrb[0].mxu0 %v459
    %v529 = vpop.f32.mrb[0].mxu0
    %v530 = vadd.f32 %v34, %v529
    %v531 = vpop.f32.mrb[0].mxu0
    %532 = vdwg.mxu0
    %v533 = vsel %vm128, %v530, -inf
    %534 = vmax.xlane.f32.xlu0 %v533
    %v535 = vpop.xlane.xlu0 %534
    %v536 = vsub.f32 %v530, %v535
    %v537 = vmul.f32 %v536, 1.442695
    %v538 = vpow.pop %v537
    %v539 = vsel %vm128, %v538, 0.0
    %540 = vadd.xlane.f32.xlu0 %v539
    %v541 = vpop.xlane.xlu0 %540
    %v542 = vrcp.pop %v541
    %v543 = vmul.f32 %v538, %v542
    %544 = vrot.lane.b32.xlu0 %v120, 48
    %v545 = vpop.permute.xlu0 %544
    %v548 = vsel %vm128, %v543, 0
    %550 = vmatprep.subr.mxu0 0.0
    %551 = vmatpush1.msra.mxu0 %v545
    %552 = vmatprep.subr.mxu0 0.0
    %553 = vmatpush1.msra.mxu0 0.0
    %554 = vmatprep.subr.mxu0 0.0
    %555 = vmatpush1.msra.mxu0 0.0
    %556 = vmatprep.subr.mxu0 0.0
    %557 = vmatpush1.msra.mxu0 0.0
    %558 = vmatprep.subr.mxu0 0.0
    %559 = vmatpush1.msra.mxu0 0.0
    %560 = vmatprep.subr.mxu0 0.0
    %561 = vmatpush1.msra.mxu0 0.0
    %562 = vmatprep.subr.mxu0 0.0
    %563 = vmatpush1.msra.mxu0 0.0
    %564 = vmatprep.subr.mxu0 0.0
    %565 = vmatpush1.msra.mxu0 0.0
    %566 = vmatprep.subr.mxu0 0.0
    %567 = vmatpush1.msra.mxu0 0.0
    %568 = vmatprep.subr.mxu0 0.0
    %569 = vmatpush1.msra.mxu0 0.0
    %570 = vmatprep.subr.mxu0 0.0
    %571 = vmatpush1.msra.mxu0 0.0
    %572 = vmatprep.subr.mxu0 0.0
    %573 = vmatpush1.msra.mxu0 0.0
    %574 = vmatprep.subr.mxu0 0.0
    %575 = vmatpush1.msra.mxu0 0.0
    %576 = vmatprep.subr.mxu0 0.0
    %577 = vmatpush1.msra.mxu0 0.0
    %578 = vmatprep.subr.mxu0 0.0
    %579 = vmatpush1.msra.mxu0 0.0
    %580 = vmatprep.subr.mxu0 0.0
    %581 = vmatpush1.msra.mxu0 0.0
    %582 = vmatprep.subr.mxu0 0.0
    %583 = vmatpush1.msra.mxu0 0.0
    %584 = vmatprep.subr.mxu0 0.0
    %585 = vmatpush1.msra.mxu0 0.0
    %586 = vmatprep.subr.mxu0 0.0
    %587 = vmatpush1.msra.mxu0 0.0
    %588 = vmatprep.subr.mxu0 0.0
    %589 = vmatpush1.msra.mxu0 0.0
    %590 = vmatprep.subr.mxu0 0.0
    %591 = vmatpush1.msra.mxu0 0.0
    %592 = vmatprep.subr.mxu0 0.0
    %593 = vmatpush1.msra.mxu0 0.0
    %594 = vmatprep.subr.mxu0 0.0
    %595 = vmatpush1.msra.mxu0 0.0
    %596 = vmatprep.subr.mxu0 0.0
    %597 = vmatpush1.msra.mxu0 0.0
    %598 = vmatprep.subr.mxu0 0.0
    %599 = vmatpush1.msra.mxu0 0.0
    %600 = vmatprep.subr.mxu0 0.0
    %601 = vmatpush1.msra.mxu0 0.0
    %602 = vmatprep.subr.mxu0 0.0
    %603 = vmatpush1.msra.mxu0 0.0
    %604 = vmatprep.subr.mxu0 0.0
    %605 = vmatpush1.msra.mxu0 0.0
    %606 = vmatprep.subr.mxu0 0.0
    %607 = vmatpush1.msra.mxu0 0.0
    %608 = vmatprep.subr.mxu0 0.0
    %609 = vmatpush1.msra.mxu0 0.0
    %610 = vmatprep.subr.mxu0 0.0
    %611 = vmatpush1.msra.mxu0 0.0
    %612 = vmatprep.subr.mxu0 0.0
    %613 = vmatpush1.msra.mxu0 0.0
    %614 = vmatprep.mubr.f32.mxu0 0.0
    %615 = vmatmul.mubr.f32.gmra.mrb[0].mxu0 %v548
    %v616 = vpop.f32.mrb[0].mxu0
    %v617 = vadd.f32 0.0, %v616
    %v618 = vpop.f32.mrb[0].mxu0
    %619 = vdwg.mxu0
    %620 = vrot.lane.b32.xlu0 %v120, 104
    %v621 = vpop.permute.xlu0 %620
    %622 = vrot.lane.b32.xlu0 %v120, 72
    %v623 = vpop.permute.xlu0 %622
    %v624 = vsel %vm128, %v621, 0
    %v626 = vsel %vm128, %v623, 0
    %628 = vmatprep.subr.mxu0 0.0
    %629 = vmatpush1.xpose.msra.mxu0 %v626
    %630 = vmatprep.subr.mxu0 0.0
    %631 = vmatpush1.xpose.msra.mxu0 0.0
    %632 = vmatprep.subr.mxu0 0.0
    %633 = vmatpush1.xpose.msra.mxu0 0.0
    %634 = vmatprep.subr.mxu0 0.0
    %635 = vmatpush1.xpose.msra.mxu0 0.0
    %636 = vmatprep.subr.mxu0 0.0
    %637 = vmatpush1.xpose.msra.mxu0 0.0
    %638 = vmatprep.subr.mxu0 0.0
    %639 = vmatpush1.xpose.msra.mxu0 0.0
    %640 = vmatprep.subr.mxu0 0.0
    %641 = vmatpush1.xpose.msra.mxu0 0.0
    %642 = vmatprep.subr.mxu0 0.0
    %643 = vmatpush1.xpose.msra.mxu0 0.0
    %644 = vmatprep.subr.mxu0 0.0
    %645 = vmatpush1.xpose.msra.mxu0 0.0
    %646 = vmatprep.subr.mxu0 0.0
    %647 = vmatpush1.xpose.msra.mxu0 0.0
    %648 = vmatprep.subr.mxu0 0.0
    %649 = vmatpush1.xpose.msra.mxu0 0.0
    %650 = vmatprep.subr.mxu0 0.0
    %651 = vmatpush1.xpose.msra.mxu0 0.0
    %652 = vmatprep.subr.mxu0 0.0
    %653 = vmatpush1.xpose.msra.mxu0 0.0
    %654 = vmatprep.subr.mxu0 0.0
    %655 = vmatpush1.xpose.msra.mxu0 0.0
    %656 = vmatprep.subr.mxu0 0.0
    %657 = vmatpush1.xpose.msra.mxu0 0.0
    %658 = vmatprep.subr.mxu0 0.0
    %659 = vmatpush1.xpose.msra.mxu0 0.0
    %660 = vmatprep.subr.mxu0 0.0
    %661 = vmatpush1.xpose.msra.mxu0 0.0
    %662 = vmatprep.subr.mxu0 0.0
    %663 = vmatpush1.xpose.msra.mxu0 0.0
    %664 = vmatprep.subr.mxu0 0.0
    %665 = vmatpush1.xpose.msra.mxu0 0.0
    %666 = vmatprep.subr.mxu0 0.0
    %667 = vmatpush1.xpose.msra.mxu0 0.0
    %668 = vmatprep.subr.mxu0 0.0
    %669 = vmatpush1.xpose.msra.mxu0 0.0
    %670 = vmatprep.subr.mxu0 0.0
    %671 = vmatpush1.xpose.msra.mxu0 0.0
    %672 = vmatprep.subr.mxu0 0.0
    %673 = vmatpush1.xpose.msra.mxu0 0.0
    %674 = vmatprep.subr.mxu0 0.0
    %675 = vmatpush1.xpose.msra.mxu0 0.0
    %676 = vmatprep.subr.mxu0 0.0
    %677 = vmatpush1.xpose.msra.mxu0 0.0
    %678 = vmatprep.subr.mxu0 0.0
    %679 = vmatpush1.xpose.msra.mxu0 0.0
    %680 = vmatprep.subr.mxu0 0.0
    %681 = vmatpush1.xpose.msra.mxu0 0.0
    %682 = vmatprep.subr.mxu0 0.0
    %683 = vmatpush1.xpose.msra.mxu0 0.0
    %684 = vmatprep.subr.mxu0 0.0
    %685 = vmatpush1.xpose.msra.mxu0 0.0
    %686 = vmatprep.subr.mxu0 0.0
    %687 = vmatpush1.xpose.msra.mxu0 0.0
    %688 = vmatprep.subr.mxu0 0.0
    %689 = vmatpush1.xpose.msra.mxu0 0.0
    %690 = vmatprep.subr.mxu0 0.0
    %691 = vmatpush1.xpose.msra.mxu0 0.0
    %692 = vmatprep.mubr.f32.mxu0 0.0
    %693 = vmatmul.mubr.f32.gmra.mrb[0].mxu0 %v624
    %v694 = vpop.f32.mrb[0].mxu0
    %v695 = vadd.f32 %v34, %v694
    %v696 = vpop.f32.mrb[0].mxu0
    %697 = vdwg.mxu0
    %v698 = vsel %vm128, %v695, -inf
    %699 = vmax.xlane.f32.xlu0 %v698
    %v700 = vpop.xlane.xlu0 %699
    %v701 = vsub.f32 %v695, %v700
    %v702 = vmul.f32 %v701, 1.442695
    %v703 = vpow.pop %v702
    %v704 = vsel %vm128, %v703, 0.0
    %705 = vadd.xlane.f32.xlu0 %v704
    %v706 = vpop.xlane.xlu0 %705
    %v707 = vrcp.pop %v706
    %v708 = vmul.f32 %v703, %v707
    %709 = vrot.lane.b32.xlu0 %v120, 40
    %v710 = vpop.permute.xlu0 %709
    %v713 = vsel %vm128, %v708, 0
    %715 = vmatprep.subr.mxu0 0.0
    %716 = vmatpush1.msra.mxu0 %v710
    %717 = vmatprep.subr.mxu0 0.0
    %718 = vmatpush1.msra.mxu0 0.0
    %719 = vmatprep.subr.mxu0 0.0
    %720 = vmatpush1.msra.mxu0 0.0
    %721 = vmatprep.subr.mxu0 0.0
    %722 = vmatpush1.msra.mxu0 0.0
    %723 = vmatprep.subr.mxu0 0.0
    %724 = vmatpush1.msra.mxu0 0.0
    %725 = vmatprep.subr.mxu0 0.0
    %726 = vmatpush1.msra.mxu0 0.0
    %727 = vmatprep.subr.mxu0 0.0
    %728 = vmatpush1.msra.mxu0 0.0
    %729 = vmatprep.subr.mxu0 0.0
    %730 = vmatpush1.msra.mxu0 0.0
    %731 = vmatprep.subr.mxu0 0.0
    %732 = vmatpush1.msra.mxu0 0.0
    %733 = vmatprep.subr.mxu0 0.0
    %734 = vmatpush1.msra.mxu0 0.0
    %735 = vmatprep.subr.mxu0 0.0
    %736 = vmatpush1.msra.mxu0 0.0
    %737 = vmatprep.subr.mxu0 0.0
    %738 = vmatpush1.msra.mxu0 0.0
    %739 = vmatprep.subr.mxu0 0.0
    %740 = vmatpush1.msra.mxu0 0.0
    %741 = vmatprep.subr.mxu0 0.0
    %742 = vmatpush1.msra.mxu0 0.0
    %743 = vmatprep.subr.mxu0 0.0
    %744 = vmatpush1.msra.mxu0 0.0
    %745 = vmatprep.subr.mxu0 0.0
    %746 = vmatpush1.msra.mxu0 0.0
    %747 = vmatprep.subr.mxu0 0.0
    %748 = vmatpush1.msra.mxu0 0.0
    %749 = vmatprep.subr.mxu0 0.0
    %750 = vmatpush1.msra.mxu0 0.0
    %751 = vmatprep.subr.mxu0 0.0
    %752 = vmatpush1.msra.mxu0 0.0
    %753 = vmatprep.subr.mxu0 0.0
    %754 = vmatpush1.msra.mxu0 0.0
    %755 = vmatprep.subr.mxu0 0.0
    %756 = vmatpush1.msra.mxu0 0.0
    %757 = vmatprep.subr.mxu0 0.0
    %758 = vmatpush1.msra.mxu0 0.0
    %759 = vmatprep.subr.mxu0 0.0
    %760 = vmatpush1.msra.mxu0 0.0
    %761 = vmatprep.subr.mxu0 0.0
    %762 = vmatpush1.msra.mxu0 0.0
    %763 = vmatprep.subr.mxu0 0.0
    %764 = vmatpush1.msra.mxu0 0.0
    %765 = vmatprep.subr.mxu0 0.0
    %766 = vmatpush1.msra.mxu0 0.0
    %767 = vmatprep.subr.mxu0 0.0
    %768 = vmatpush1.msra.mxu0 0.0
    %769 = vmatprep.subr.mxu0 0.0
    %770 = vmatpush1.msra.mxu0 0.0
    %771 = vmatprep.subr.mxu0 0.0
    %772 = vmatpush1.msra.mxu0 0.0
    %773 = vmatprep.subr.mxu0 0.0
    %774 = vmatpush1.msra.mxu0 0.0
    %775 = vmatprep.subr.mxu0 0.0
    %776 = vmatpush1.msra.mxu0 0.0
    %777 = vmatprep.subr.mxu0 0.0
    %778 = vmatpush1.msra.mxu0 0.0
    %779 = vmatprep.mubr.f32.mxu0 0.0
    %780 = vmatmul.mubr.f32.gmra.mrb[0].mxu0 %v713
    %v781 = vpop.f32.mrb[0].mxu0
    %v782 = vadd.f32 0.0, %v781
    %v783 = vpop.f32.mrb[0].mxu0
    %784 = vdwg.mxu0
    %786 = vrot.lane.b32.xlu0 %v452, 8
    %v787 = vpop.permute.xlu0 %786
    %790 = vrot.lane.b32.xlu0 %v617, 16
    %v791 = vpop.permute.xlu0 %790
    %794 = vrot.lane.b32.xlu0 %v782, 24
    %v795 = vpop.permute.xlu0 %794
    %v797 = vsel %vm128, %v287, %v787
    %vm798 = vcmask 130048
    %v799 = vsel %vm798, %v797, %v791
    %vm800 = vcmask 195584
    %v801 = vsel %vm800, %v799, %v795
    %v802 = vpack.c.bf16 %v801, %v801
    %v803 = vld [vmem:[%s2] sm:$0xf]
    %v804 = vld [vmem:[%s2 + $0x4] sm:$0xf]
    %v805 = vld [vmem:[%s2 + $0x8] sm:$0xf]
    %v806 = vld [vmem:[%s2 + $0xc] sm:$0xf]
    %v807 = vlaneseq
    %v808 = vshrl.u32 %v807, 7
    %v809 = vsub.s32 3, %v808
    %v810 = vrot.slane %v35, %v809
    %v815 = vunpack.c.l.b16 %v803
    %v816 = vunpack.c.l.b16 %v804
    %v817 = vunpack.c.l.b16 %v805
    %v818 = vunpack.c.l.b16 %v806
    %v819 = vpack.c.b16 %v816, %v815
    %v820 = vpack.c.b16 %v818, %v817
    %v824 = vsel %vm36, %v802, 0
    %826 = vmatprep.subr.bf16.mxu0 0
    %827 = vmatpush1.bf16.msra.mxu0 %v819
    %828 = vmatprep.subr.bf16.mxu0 0
    %829 = vmatpush1.bf16.msra.mxu0 %v820
    %830 = vmatprep.subr.bf16.mxu0 0
    %831 = vmatpush1.bf16.msra.mxu0 0
    %832 = vmatprep.subr.bf16.mxu0 0
    %833 = vmatpush1.bf16.msra.mxu0 0
    %834 = vmatprep.subr.bf16.mxu0 0
    %835 = vmatpush1.bf16.msra.mxu0 0
    %836 = vmatprep.subr.bf16.mxu0 0
    %837 = vmatpush1.bf16.msra.mxu0 0
    %838 = vmatprep.subr.bf16.mxu0 0
    %839 = vmatpush1.bf16.msra.mxu0 0
    %840 = vmatprep.subr.bf16.mxu0 0
    %841 = vmatpush1.bf16.msra.mxu0 0
    %842 = vmatprep.subr.bf16.mxu0 0
    %843 = vmatpush1.bf16.msra.mxu0 0
    %844 = vmatprep.subr.bf16.mxu0 0
    %845 = vmatpush1.bf16.msra.mxu0 0
    %846 = vmatprep.subr.bf16.mxu0 0
    %847 = vmatpush1.bf16.msra.mxu0 0
    %848 = vmatprep.subr.bf16.mxu0 0
    %849 = vmatpush1.bf16.msra.mxu0 0
    %850 = vmatprep.subr.bf16.mxu0 0
    %851 = vmatpush1.bf16.msra.mxu0 0
    %852 = vmatprep.subr.bf16.mxu0 0
    %853 = vmatpush1.bf16.msra.mxu0 0
    %854 = vmatprep.subr.bf16.mxu0 0
    %855 = vmatpush1.bf16.msra.mxu0 0
    %856 = vmatprep.subr.bf16.mxu0 0
    %857 = vmatpush1.bf16.msra.mxu0 0
    %858 = vmatprep.mubr.bf16.mxu0 0
    %859 = vmatmul.mubr.bf16.gmra.mrb[0].mxu0 %v824
    %v860 = vpop.f32.mrb[0].mxu0
    %v861 = vadd.f32 %v810, %v860
    %v862 = vpop.f32.mrb[0].mxu0
    %v863 = vpop.f32.mrb[0].mxu0
    %v864 = vpop.f32.mrb[0].mxu0
    %865 = vdwg.mxu0
    %v866 = vadd.f32 %v28, %v861
    %v867 = vsel %vm36, %v866, 0.0
    %868 = vadd.xlane.f32.xlu0 %v867
    %v869 = vpop.xlane.xlu0 %868
    %v870 = vmul.f32 %v869, %v40
    %v871 = vsub.f32 %v866, %v870
    %v872 = vmul.f32 %v871, %v871
    %v873 = vsel %vm36, %v872, 0.0
    %874 = vadd.xlane.f32.xlu0 %v873
    %v875 = vpop.xlane.xlu0 %874
    %v876 = vmul.f32 %v875, %v40
    %v877 = vadd.f32 %v876, 1e-05
    %v878 = vrsqrt.pop %v877
    %v879 = vmul.f32 %v871, %v878
    %v880 = vlaneseq
    %v881 = vshrl.u32 %v880, 7
    %v882 = vsub.s32 4, %v881
    %v883 = vrot.slane %v35, %v882
    %v884 = vmul.f32 %v879, %v883
    %v885 = vlaneseq
    %v886 = vshrl.u32 %v885, 7
    %v887 = vsub.s32 5, %v886
    %v888 = vrot.slane %v35, %v887
    %v889 = vadd.f32 %v884, %v888
    %v890 = vpack.c.bf16 %v889, %v889
    %v891 = vld [vmem:[%s3] sm:$0xf]
    %v892 = vld [vmem:[%s3 + $0x4] sm:$0xf]
    %v893 = vld [vmem:[%s3 + $0x8] sm:$0xf]
    %v894 = vld [vmem:[%s3 + $0xc] sm:$0xf]
    %v895 = vlaneseq
    %v896 = vshrl.u32 %v895, 7
    %v897 = vsub.s32 6, %v896
    %v898 = vrot.slane %v35, %v897
    %v903 = vunpack.c.l.b16 %v891
    %v904 = vunpack.c.l.b16 %v892
    %v905 = vunpack.c.l.b16 %v893
    %v906 = vunpack.c.l.b16 %v894
    %v907 = vpack.c.b16 %v904, %v903
    %v908 = vpack.c.b16 %v906, %v905
    %v912 = vsel %vm36, %v890, 0
    %914 = vmatprep.subr.bf16.mxu0 0
    %915 = vmatpush1.bf16.msra.mxu0 %v907
    %916 = vmatprep.subr.bf16.mxu0 0
    %917 = vmatpush1.bf16.msra.mxu0 %v908
    %918 = vmatprep.subr.bf16.mxu0 0
    %919 = vmatpush1.bf16.msra.mxu0 0
    %920 = vmatprep.subr.bf16.mxu0 0
    %921 = vmatpush1.bf16.msra.mxu0 0
    %922 = vmatprep.subr.bf16.mxu0 0
    %923 = vmatpush1.bf16.msra.mxu0 0
    %924 = vmatprep.subr.bf16.mxu0 0
    %925 = vmatpush1.bf16.msra.mxu0 0
    %926 = vmatprep.subr.bf16.mxu0 0
    %927 = vmatpush1.bf16.msra.mxu0 0
    %928 = vmatprep.subr.bf16.mxu0 0
    %929 = vmatpush1.bf16.msra.mxu0 0
    %930 = vmatprep.subr.bf16.mxu0 0
    %931 = vmatpush1.bf16.msra.mxu0 0
    %932 = vmatprep.subr.bf16.mxu0 0
    %933 = vmatpush1.bf16.msra.mxu0 0
    %934 = vmatprep.subr.bf16.mxu0 0
    %935 = vmatpush1.bf16.msra.mxu0 0
    %936 = vmatprep.subr.bf16.mxu0 0
    %937 = vmatpush1.bf16.msra.mxu0 0
    %938 = vmatprep.subr.bf16.mxu0 0
    %939 = vmatpush1.bf16.msra.mxu0 0
    %940 = vmatprep.subr.bf16.mxu0 0
    %941 = vmatpush1.bf16.msra.mxu0 0
    %942 = vmatprep.subr.bf16.mxu0 0
    %943 = vmatpush1.bf16.msra.mxu0 0
    %944 = vmatprep.subr.bf16.mxu0 0
    %945 = vmatpush1.bf16.msra.mxu0 0
    %946 = vmatprep.mubr.bf16.mxu0 0
    %947 = vmatmul.mubr.bf16.gmra.mrb[0].mxu0 %v912
    %v948 = vpop.f32.mrb[0].mxu0
    %v949 = vadd.f32 %v898, %v948
    %v950 = vpop.f32.mrb[0].mxu0
    %v951 = vpop.f32.mrb[0].mxu0
    %v952 = vpop.f32.mrb[0].mxu0
    %953 = vdwg.mxu0
    %v954 = vmul.f32 %v949, 0.5
    %v955 = vmul.f32 %v949, 0.044715
    %v956 = vmul.f32 %v955, %v949
    %v957 = vmul.f32 %v956, %v949
    %v958 = vadd.f32 %v949, %v957
    %v959 = vmul.f32 %v958, 0.7978846
    %v960 = vtanh.pop %v959
    %v961 = vadd.f32 %v960, 1.0
    %v962 = vmul.f32 %v954, %v961
    %v963 = vpack.c.bf16 %v962, %v962
    %v964 = vld [vmem:[%s4] sm:$0xf]
    %v965 = vld [vmem:[%s4 + $0x4] sm:$0xf]
    %v966 = vld [vmem:[%s4 + $0x8] sm:$0xf]
    %v967 = vld [vmem:[%s4 + $0xc] sm:$0xf]
    %v968 = vld [vmem:[%s4 + $0x10] sm:$0xf]
    %v969 = vld [vmem:[%s4 + $0x14] sm:$0xf]
    %v970 = vld [vmem:[%s4 + $0x18] sm:$0xf]
    %v971 = vld [vmem:[%s4 + $0x1c] sm:$0xf]
    %v972 = vld [vmem:[%s4 + $0x20] sm:$0xf]
    %v973 = vld [vmem:[%s4 + $0x24] sm:$0xf]
    %v974 = vld [vmem:[%s4 + $0x28] sm:$0xf]
    %v975 = vld [vmem:[%s4 + $0x2c] sm:$0xf]
    %v976 = vld [vmem:[%s4 + $0x30] sm:$0xf]
    %v977 = vld [vmem:[%s4 + $0x34] sm:$0xf]
    %v978 = vld [vmem:[%s4 + $0x38] sm:$0xf]
    %v979 = vld [vmem:[%s4 + $0x3c] sm:$0xf]
    %v980 = vlaneseq
    %v981 = vshrl.u32 %v980, 7
    %v982 = vsub.s32 7, %v981
    %v983 = vrot.slane %v35, %v982
    %v1000 = vunpack.c.l.b16 %v964
    %v1001 = vunpack.c.l.b16 %v965
    %v1002 = vunpack.c.l.b16 %v966
    %v1003 = vunpack.c.l.b16 %v967
    %v1004 = vunpack.c.l.b16 %v968
    %v1005 = vunpack.c.l.b16 %v969
    %v1006 = vunpack.c.l.b16 %v970
    %v1007 = vunpack.c.l.b16 %v971
    %v1008 = vunpack.c.l.b16 %v972
    %v1009 = vunpack.c.l.b16 %v973
    %v1010 = vunpack.c.l.b16 %v974
    %v1011 = vunpack.c.l.b16 %v975
    %v1012 = vunpack.c.l.b16 %v976
    %v1013 = vunpack.c.l.b16 %v977
    %v1014 = vunpack.c.l.b16 %v978
    %v1015 = vunpack.c.l.b16 %v979
    %v1016 = vpack.c.b16 %v1001, %v1000
    %v1017 = vpack.c.b16 %v1003, %v1002
    %v1018 = vpack.c.b16 %v1005, %v1004
    %v1019 = vpack.c.b16 %v1007, %v1006
    %v1020 = vpack.c.b16 %v1009, %v1008
    %v1021 = vpack.c.b16 %v1011, %v1010
    %v1022 = vpack.c.b16 %v1013, %v1012
    %v1023 = vpack.c.b16 %v1015, %v1014
    %1032 = vmatprep.subr.bf16.mxu0 0
    %1033 = vmatpush1.bf16.msra.mxu0 %v1016
    %1034 = vmatprep.subr.bf16.mxu0 0
    %1035 = vmatpush1.bf16.msra.mxu0 %v1017
    %1036 = vmatprep.subr.bf16.mxu0 0
    %1037 = vmatpush1.bf16.msra.mxu0 %v1018
    %1038 = vmatprep.subr.bf16.mxu0 0
    %1039 = vmatpush1.bf16.msra.mxu0 %v1019
    %1040 = vmatprep.subr.bf16.mxu0 0
    %1041 = vmatpush1.bf16.msra.mxu0 %v1020
    %1042 = vmatprep.subr.bf16.mxu0 0
    %1043 = vmatpush1.bf16.msra.mxu0 %v1021
    %1044 = vmatprep.subr.bf16.mxu0 0
    %1045 = vmatpush1.bf16.msra.mxu0 %v1022
    %1046 = vmatprep.subr.bf16.mxu0 0
    %1047 = vmatpush1.bf16.msra.mxu0 %v1023
    %1048 = vmatprep.subr.bf16.mxu0 0
    %1049 = vmatpush1.bf16.msra.mxu0 0
    %1050 = vmatprep.subr.bf16.mxu0 0
    %1051 = vmatpush1.bf16.msra.mxu0 0
    %1052 = vmatprep.subr.bf16.mxu0 0
    %1053 = vmatpush1.bf16.msra.mxu0 0
    %1054 = vmatprep.subr.bf16.mxu0 0
    %1055 = vmatpush1.bf16.msra.mxu0 0
    %1056 = vmatprep.subr.bf16.mxu0 0
    %1057 = vmatpush1.bf16.msra.mxu0 0
    %1058 = vmatprep.subr.bf16.mxu0 0
    %1059 = vmatpush1.bf16.msra.mxu0 0
    %1060 = vmatprep.subr.bf16.mxu0 0
    %1061 = vmatpush1.bf16.msra.mxu0 0
    %1062 = vmatprep.subr.bf16.mxu0 0
    %1063 = vmatpush1.bf16.msra.mxu0 0
    %1064 = vmatprep.mubr.bf16.mxu0 0
    %1065 = vmatmul.mubr.bf16.gmra.mrb[0].mxu0 %v963
    %v1066 = vpop.f32.mrb[0].mxu0
    %v1067 = vadd.f32 %v983, %v1066
    %v1068 = vpop.f32.mrb[0].mxu0
    %v1069 = vpop.f32.mrb[0].mxu0
    %v1070 = vpop.f32.mrb[0].mxu0
    %1071 = vdwg.mxu0
    %v1072 = vadd.f32 %v866, %v1067
    %s1073 = scalar_lea.vmem %s5, 8
    %v1074 = vld [vmem:[%s1073] sm:$0xff]
    %v1075 = vsel %vm36, %v1072, 0.0
    %1076 = vadd.xlane.f32.xlu0 %v1075
    %v1077 = vpop.xlane.xlu0 %1076
    %v1078 = vmul.f32 %v1077, %v40
    %v1079 = vsub.f32 %v1072, %v1078
    %v1080 = vmul.f32 %v1079, %v1079
    %v1081 = vsel %vm36, %v1080, 0.0
    %1082 = vadd.xlane.f32.xlu0 %v1081
    %v1083 = vpop.xlane.xlu0 %1082
    %v1084 = vmul.f32 %v1083, %v40
    %v1085 = vadd.f32 %v1084, 1e-05
    %v1086 = vrsqrt.pop %v1085
    %v1087 = vmul.f32 %v1079, %v1086
    %v1088 = vlaneseq
    %v1089 = vshrl.u32 %v1088, 7
    %v1090 = vsub.s32 0, %v1089
    %v1091 = vrot.slane %v1074, %v1090
    %v1092 = vmul.f32 %v1087, %v1091
    %v1093 = vlaneseq
    %v1094 = vshrl.u32 %v1093, 7
    %v1095 = vsub.s32 1, %v1094
    %v1096 = vrot.slane %v1074, %v1095
    %v1097 = vadd.f32 %v1092, %v1096
    %v1098 = vpack.c.bf16 %v1097, %v1097
    %s1099 = scalar_lea.vmem %s1, 16
    %v1100 = vld [vmem:[%s1099] sm:$0xf]
    %v1101 = vld [vmem:[%s1099 + $0x4] sm:$0xf]
    %v1102 = vld [vmem:[%s1099 + $0x8] sm:$0xf]
    %v1103 = vld [vmem:[%s1099 + $0xc] sm:$0xf]
    %v1104 = vlaneseq
    %v1105 = vshrl.u32 %v1104, 7
    %v1106 = vsub.s32 2, %v1105
    %v1107 = vrot.slane %v1074, %v1106
    %v1112 = vunpack.c.l.b16 %v1100
    %v1113 = vunpack.c.l.b16 %v1101
    %v1114 = vunpack.c.l.b16 %v1102
    %v1115 = vunpack.c.l.b16 %v1103
    %v1116 = vpack.c.b16 %v1113, %v1112
    %v1117 = vpack.c.b16 %v1115, %v1114
    %v1121 = vsel %vm36, %v1098, 0
    %1123 = vmatprep.subr.bf16.mxu0 0
    %1124 = vmatpush1.bf16.msra.mxu0 %v1116
    %1125 = vmatprep.subr.bf16.mxu0 0
    %1126 = vmatpush1.bf16.msra.mxu0 %v1117
    %1127 = vmatprep.subr.bf16.mxu0 0
    %1128 = vmatpush1.bf16.msra.mxu0 0
    %1129 = vmatprep.subr.bf16.mxu0 0
    %1130 = vmatpush1.bf16.msra.mxu0 0
    %1131 = vmatprep.subr.bf16.mxu0 0
    %1132 = vmatpush1.bf16.msra.mxu0 0
    %1133 = vmatprep.subr.bf16.mxu0 0
    %1134 = vmatpush1.bf16.msra.mxu0 0
    %1135 = vmatprep.subr.bf16.mxu0 0
    %1136 = vmatpush1.bf16.msra.mxu0 0
    %1137 = vmatprep.subr.bf16.mxu0 0
    %1138 = vmatpush1.bf16.msra.mxu0 0
    %1139 = vmatprep.subr.bf16.mxu0 0
    %1140 = vmatpush1.bf16.msra.mxu0 0
    %1141 = vmatprep.subr.bf16.mxu0 0
    %1142 = vmatpush1.bf16.msra.mxu0 0
    %1143 = vmatprep.subr.bf16.mxu0 0
    %1144 = vmatpush1.bf16.msra.mxu0 0
    %1145 = vmatprep.subr.bf16.mxu0 0
    %1146 = vmatpush1.bf16.msra.mxu0 0
    %1147 = vmatprep.subr.bf16.mxu0 0
    %1148 = vmatpush1.bf16.msra.mxu0 0
    %1149 = vmatprep.subr.bf16.mxu0 0
    %1150 = vmatpush1.bf16.msra.mxu0 0
    %1151 = vmatprep.subr.bf16.mxu0 0
    %1152 = vmatpush1.bf16.msra.mxu0 0
    %1153 = vmatprep.subr.bf16.mxu0 0
    %1154 = vmatpush1.bf16.msra.mxu0 0
    %1155 = vmatprep.mubr.bf16.mxu0 0
    %1156 = vmatmul.mubr.bf16.gmra.mrb[0].mxu0 %v1121
    %v1157 = vpop.f32.mrb[0].mxu0
    %v1158 = vadd.f32 %v1107, %v1157
    %v1159 = vpop.f32.mrb[0].mxu0
    %v1160 = vpop.f32.mrb[0].mxu0
    %v1161 = vpop.f32.mrb[0].mxu0
    %1162 = vdwg.mxu0
    %1164 = vrot.lane.b32.xlu0 %v1158, 96
    %v1165 = vpop.permute.xlu0 %1164
    %v1166 = vsel %vm128, %v1158, 0
    %v1168 = vsel %vm128, %v1165, 0
    %1170 = vmatprep.subr.mxu0 0.0
    %1171 = vmatpush1.xpose.msra.mxu0 %v1168
    %1172 = vmatprep.subr.mxu0 0.0
    %1173 = vmatpush1.xpose.msra.mxu0 0.0
    %1174 = vmatprep.subr.mxu0 0.0
    %1175 = vmatpush1.xpose.msra.mxu0 0.0
    %1176 = vmatprep.subr.mxu0 0.0
    %1177 = vmatpush1.xpose.msra.mxu0 0.0
    %1178 = vmatprep.subr.mxu0 0.0
    %1179 = vmatpush1.xpose.msra.mxu0 0.0
    %1180 = vmatprep.subr.mxu0 0.0
    %1181 = vmatpush1.xpose.msra.mxu0 0.0
    %1182 = vmatprep.subr.mxu0 0.0
    %1183 = vmatpush1.xpose.msra.mxu0 0.0
    %1184 = vmatprep.subr.mxu0 0.0
    %1185 = vmatpush1.xpose.msra.mxu0 0.0
    %1186 = vmatprep.subr.mxu0 0.0
    %1187 = vmatpush1.xpose.msra.mxu0 0.0
    %1188 = vmatprep.subr.mxu0 0.0
    %1189 = vmatpush1.xpose.msra.mxu0 0.0
    %1190 = vmatprep.subr.mxu0 0.0
    %1191 = vmatpush1.xpose.msra.mxu0 0.0
    %1192 = vmatprep.subr.mxu0 0.0
    %1193 = vmatpush1.xpose.msra.mxu0 0.0
    %1194 = vmatprep.subr.mxu0 0.0
    %1195 = vmatpush1.xpose.msra.mxu0 0.0
    %1196 = vmatprep.subr.mxu0 0.0
    %1197 = vmatpush1.xpose.msra.mxu0 0.0
    %1198 = vmatprep.subr.mxu0 0.0
    %1199 = vmatpush1.xpose.msra.mxu0 0.0
    %1200 = vmatprep.subr.mxu0 0.0
    %1201 = vmatpush1.xpose.msra.mxu0 0.0
    %1202 = vmatprep.subr.mxu0 0.0
    %1203 = vmatpush1.xpose.msra.mxu0 0.0
    %1204 = vmatprep.subr.mxu0 0.0
    %1205 = vmatpush1.xpose.msra.mxu0 0.0
    %1206 = vmatprep.subr.mxu0 0.0
    %1207 = vmatpush1.xpose.msra.mxu0 0.0
    %1208 = vmatprep.subr.mxu0 0.0
    %1209 = vmatpush1.xpose.msra.mxu0 0.0
    %1210 = vmatprep.subr.mxu0 0.0
    %1211 = vmatpush1.xpose.msra.mxu0 0.0
    %1212 = vmatprep.subr.mxu0 0.0
    %1213 = vmatpush1.xpose.msra.mxu0 0.0
    %1214 = vmatprep.subr.mxu0 0.0
    %1215 = vmatpush1.xpose.msra.mxu0 0.0
    %1216 = vmatprep.subr.mxu0 0.0
    %1217 = vmatpush1.xpose.msra.mxu0 0.0
    %1218 = vmatprep.subr.mxu0 0.0
    %1219 = vmatpush1.xpose.msra.mxu0 0.0
    %1220 = vmatprep.subr.mxu0 0.0
    %1221 = vmatpush1.xpose.msra.mxu0 0.0
    %1222 = vmatprep.subr.mxu0 0.0
    %1223 = vmatpush1.xpose.msra.mxu0 0.0
    %1224 = vmatprep.subr.mxu0 0.0
    %1225 = vmatpush1.xpose.msra.mxu0 0.0
    %1226 = vmatprep.subr.mxu0 0.0
    %1227 = vmatpush1.xpose.msra.mxu0 0.0
    %1228 = vmatprep.subr.mxu0 0.0
    %1229 = vmatpush1.xpose.msra.mxu0 0.0
    %1230 = vmatprep.subr.mxu0 0.0
    %1231 = vmatpush1.xpose.msra.mxu0 0.0
    %1232 = vmatprep.subr.mxu0 0.0
    %1233 = vmatpush1.xpose.msra.mxu0 0.0
    %1234 = vmatprep.mubr.f32.mxu0 0.0
    %1235 = vmatmul.mubr.f32.gmra.mrb[0].mxu0 %v1166
    %v1236 = vpop.f32.mrb[0].mxu0
    %v1237 = vadd.f32 %v34, %v1236
    %v1238 = vpop.f32.mrb[0].mxu0
    %1239 = vdwg.mxu0
    %v1240 = vsel %vm128, %v1237, -inf
    %1241 = vmax.xlane.f32.xlu0 %v1240
    %v1242 = vpop.xlane.xlu0 %1241
    %v1243 = vsub.f32 %v1237, %v1242
    %v1244 = vmul.f32 %v1243, 1.442695
    %v1245 = vpow.pop %v1244
    %v1246 = vsel %vm128, %v1245, 0.0
    %1247 = vadd.xlane.f32.xlu0 %v1246
    %v1248 = vpop.xlane.xlu0 %1247
    %v1249 = vrcp.pop %v1248
    %v1250 = vmul.f32 %v1245, %v1249
    %1251 = vrot.lane.b32.xlu0 %v1158, 64
    %v1252 = vpop.permute.xlu0 %1251
    %v1255 = vsel %vm128, %v1250, 0
    %1257 = vmatprep.subr.mxu0 0.0
    %1258 = vmatpush1.msra.mxu0 %v1252
    %1259 = vmatprep.subr.mxu0 0.0
    %1260 = vmatpush1.msra.mxu0 0.0
    %1261 = vmatprep.subr.mxu0 0.0
    %1262 = vmatpush1.msra.mxu0 0.0
    %1263 = vmatprep.subr.mxu0 0.0
    %1264 = vmatpush1.msra.mxu0 0.0
    %1265 = vmatprep.subr.mxu0 0.0
    %1266 = vmatpush1.msra.mxu0 0.0
    %1267 = vmatprep.subr.mxu0 0.0
    %1268 = vmatpush1.msra.mxu0 0.0
    %1269 = vmatprep.subr.mxu0 0.0
    %1270 = vmatpush1.msra.mxu0 0.0
    %1271 = vmatprep.subr.mxu0 0.0
    %1272 = vmatpush1.msra.mxu0 0.0
    %1273 = vmatprep.subr.mxu0 0.0
    %1274 = vmatpush1.msra.mxu0 0.0
    %1275 = vmatprep.subr.mxu0 0.0
    %1276 = vmatpush1.msra.mxu0 0.0
    %1277 = vmatprep.subr.mxu0 0.0
    %1278 = vmatpush1.msra.mxu0 0.0
    %1279 = vmatprep.subr.mxu0 0.0
    %1280 = vmatpush1.msra.mxu0 0.0
    %1281 = vmatprep.subr.mxu0 0.0
    %1282 = vmatpush1.msra.mxu0 0.0
    %1283 = vmatprep.subr.mxu0 0.0
    %1284 = vmatpush1.msra.mxu0 0.0
    %1285 = vmatprep.subr.mxu0 0.0
    %1286 = vmatpush1.msra.mxu0 0.0
    %1287 = vmatprep.subr.mxu0 0.0
    %1288 = vmatpush1.msra.mxu0 0.0
    %1289 = vmatprep.subr.mxu0 0.0
    %1290 = vmatpush1.msra.mxu0 0.0
    %1291 = vmatprep.subr.mxu0 0.0
    %1292 = vmatpush1.msra.mxu0 0.0
    %1293 = vmatprep.subr.mxu0 0.0
    %1294 = vmatpush1.msra.mxu0 0.0
    %1295 = vmatprep.subr.mxu0 0.0
    %1296 = vmatpush1.msra.mxu0 0.0
    %1297 = vmatprep.subr.mxu0 0.0
    %1298 = vmatpush1.msra.mxu0 0.0
    %1299 = vmatprep.subr.mxu0 0.0
    %1300 = vmatpush1.msra.mxu0 0.0
    %1301 = vmatprep.subr.mxu0 0.0
    %1302 = vmatpush1.msra.mxu0 0.0
    %1303 = vmatprep.subr.mxu0 0.0
    %1304 = vmatpush1.msra.mxu0 0.0
    %1305 = vmatprep.subr.mxu0 0.0
    %1306 = vmatpush1.msra.mxu0 0.0
    %1307 = vmatprep.subr.mxu0 0.0
    %1308 = vmatpush1.msra.mxu0 0.0
    %1309 = vmatprep.subr.mxu0 0.0
    %1310 = vmatpush1.msra.mxu0 0.0
    %1311 = vmatprep.subr.mxu0 0.0
    %1312 = vmatpush1.msra.mxu0 0.0
    %1313 = vmatprep.subr.mxu0 0.0
    %1314 = vmatpush1.msra.mxu0 0.0
    %1315 = vmatprep.subr.mxu0 0.0
    %1316 = vmatpush1.msra.mxu0 0.0
    %1317 = vmatprep.subr.mxu0 0.0
    %1318 = vmatpush1.msra.mxu0 0.0
    %1319 = vmatprep.subr.mxu0 0.0
    %1320 = vmatpush1.msra.mxu0 0.0
    %1321 = vmatprep.mubr.f32.mxu0 0.0
    %1322 = vmatmul.mubr.f32.gmra.mrb[0].mxu0 %v1255
    %v1323 = vpop.f32.mrb[0].mxu0
    %v1324 = vadd.f32 0.0, %v1323
    %v1325 = vpop.f32.mrb[0].mxu0
    %1326 = vdwg.mxu0
    %1327 = vrot.lane.b32.xlu0 %v1158, 120
    %v1328 = vpop.permute.xlu0 %1327
    %1329 = vrot.lane.b32.xlu0 %v1158, 88
    %v1330 = vpop.permute.xlu0 %1329
    %v1331 = vsel %vm128, %v1328, 0
    %v1333 = vsel %vm128, %v1330, 0
    %1335 = vmatprep.subr.mxu0 0.0
    %1336 = vmatpush1.xpose.msra.mxu0 %v1333
    %1337 = vmatprep.subr.mxu0 0.0
    %1338 = vmatpush1.xpose.msra.mxu0 0.0
    %1339 = vmatprep.subr.mxu0 0.0
    %1340 = vmatpush1.xpose.msra.mxu0 0.0
    %1341 = vmatprep.subr.mxu0 0.0
    %1342 = vmatpush1.xpose.msra.mxu0 0.0
    %1343 = vmatprep.subr.mxu0 0.0
    %1344 = vmatpush1.xpose.msra.mxu0 0.0
    %1345 = vmatprep.subr.mxu0 0.0
    %1346 = vmatpush1.xpose.msra.mxu0 0.0
    %1347 = vmatprep.subr.mxu0 0.0
    %1348 = vmatpush1.xpose.msra.mxu0 0.0
    %1349 = vmatprep.subr.mxu0 0.0
    %1350 = vmatpush1.xpose.msra.mxu0 0.0
    %1351 = vmatprep.subr.mxu0 0.0
    %1352 = vmatpush1.xpose.msra.mxu0 0.0
    %1353 = vmatprep.subr.mxu0 0.0
    %1354 = vmatpush1.xpose.msra.mxu0 0.0
    %1355 = vmatprep.subr.mxu0 0.0
    %1356 = vmatpush1.xpose.msra.mxu0 0.0
    %1357 = vmatprep.subr.mxu0 0.0
    %1358 = vmatpush1.xpose.msra.mxu0 0.0
    %1359 = vmatprep.subr.mxu0 0.0
    %1360 = vmatpush1.xpose.msra.mxu0 0.0
    %1361 = vmatprep.subr.mxu0 0.0
    %1362 = vmatpush1.xpose.msra.mxu0 0.0
    %1363 = vmatprep.subr.mxu0 0.0
    %1364 = vmatpush1.xpose.msra.mxu0 0.0
    %1365 = vmatprep.subr.mxu0 0.0
    %1366 = vmatpush1.xpose.msra.mxu0 0.0
    %1367 = vmatprep.subr.mxu0 0.0
    %1368 = vmatpush1.xpose.msra.mxu0 0.0
    %1369 = vmatprep.subr.mxu0 0.0
    %1370 = vmatpush1.xpose.msra.mxu0 0.0
    %1371 = vmatprep.subr.mxu0 0.0
    %1372 = vmatpush1.xpose.msra.mxu0 0.0
    %1373 = vmatprep.subr.mxu0 0.0
    %1374 = vmatpush1.xpose.msra.mxu0 0.0
    %1375 = vmatprep.subr.mxu0 0.0
    %1376 = vmatpush1.xpose.msra.mxu0 0.0
    %1377 = vmatprep.subr.mxu0 0.0
    %1378 = vmatpush1.xpose.msra.mxu0 0.0
    %1379 = vmatprep.subr.mxu0 0.0
    %1380 = vmatpush1.xpose.msra.mxu0 0.0
    %1381 = vmatprep.subr.mxu0 0.0
    %1382 = vmatpush1.xpose.msra.mxu0 0.0
    %1383 = vmatprep.subr.mxu0 0.0
    %1384 = vmatpush1.xpose.msra.mxu0 0.0
    %1385 = vmatprep.subr.mxu0 0.0
    %1386 = vmatpush1.xpose.msra.mxu0 0.0
    %1387 = vmatprep.subr.mxu0 0.0
    %1388 = vmatpush1.xpose.msra.mxu0 0.0
    %1389 = vmatprep.subr.mxu0 0.0
    %1390 = vmatpush1.xpose.msra.mxu0 0.0
    %1391 = vmatprep.subr.mxu0 0.0
    %1392 = vmatpush1.xpose.msra.mxu0 0.0
    %1393 = vmatprep.subr.mxu0 0.0
    %1394 = vmatpush1.xpose.msra.mxu0 0.0
    %1395 = vmatprep.subr.mxu0 0.0
    %1396 = vmatpush1.xpose.msra.mxu0 0.0
    %1397 = vmatprep.subr.mxu0 0.0
    %1398 = vmatpush1.xpose.msra.mxu0 0.0
    %1399 = vmatprep.mubr.f32.mxu0 0.0
    %1400 = vmatmul.mubr.f32.gmra.mrb[0].mxu0 %v1331
    %v1401 = vpop.f32.mrb[0].mxu0
    %v1402 = vadd.f32 %v34, %v1401
    %v1403 = vpop.f32.mrb[0].mxu0
    %1404 = vdwg.mxu0
    %v1405 = vsel %vm128, %v1402, -inf
    %1406 = vmax.xlane.f32.xlu0 %v1405
    %v1407 = vpop.xlane.xlu0 %1406
    %v1408 = vsub.f32 %v1402, %v1407
    %v1409 = vmul.f32 %v1408, 1.442695
    %v1410 = vpow.pop %v1409
    %v1411 = vsel %vm128, %v1410, 0.0
    %1412 = vadd.xlane.f32.xlu0 %v1411
    %v1413 = vpop.xlane.xlu0 %1412
    %v1414 = vrcp.pop %v1413
    %v1415 = vmul.f32 %v1410, %v1414
    %1416 = vrot.lane.b32.xlu0 %v1158, 56
    %v1417 = vpop.permute.xlu0 %1416
    %v1420 = vsel %vm128, %v1415, 0
    %1422 = vmatprep.subr.mxu0 0.0
    %1423 = vmatpush1.msra.mxu0 %v1417
    %1424 = vmatprep.subr.mxu0 0.0
    %1425 = vmatpush1.msra.mxu0 0.0
    %1426 = vmatprep.subr.mxu0 0.0
    %1427 = vmatpush1.msra.mxu0 0.0
    %1428 = vmatprep.subr.mxu0 0.0
    %1429 = vmatpush1.msra.mxu0 0.0
    %1430 = vmatprep.subr.mxu0 0.0
    %1431 = vmatpush1.msra.mxu0 0.0
    %1432 = vmatprep.subr.mxu0 0.0
    %1433 = vmatpush1.msra.mxu0 0.0
    %1434 = vmatprep.subr.mxu0 0.0
    %1435 = vmatpush1.msra.mxu0 0.0
    %1436 = vmatprep.subr.mxu0 0.0
    %1437 = vmatpush1.msra.mxu0 0.0
    %1438 = vmatprep.subr.mxu0 0.0
    %1439 = vmatpush1.msra.mxu0 0.0
    %1440 = vmatprep.subr.mxu0 0.0
    %1441 = vmatpush1.msra.mxu0 0.0
    %1442 = vmatprep.subr.mxu0 0.0
    %1443 = vmatpush1.msra.mxu0 0.0
    %1444 = vmatprep.subr.mxu0 0.0
    %1445 = vmatpush1.msra.mxu0 0.0
    %1446 = vmatprep.subr.mxu0 0.0
    %1447 = vmatpush1.msra.mxu0 0.0
    %1448 = vmatprep.subr.mxu0 0.0
    %1449 = vmatpush1.msra.mxu0 0.0
    %1450 = vmatprep.subr.mxu0 0.0
    %1451 = vmatpush1.msra.mxu0 0.0
    %1452 = vmatprep.subr.mxu0 0.0
    %1453 = vmatpush1.msra.mxu0 0.0
    %1454 = vmatprep.subr.mxu0 0.0
    %1455 = vmatpush1.msra.mxu0 0.0
    %1456 = vmatprep.subr.mxu0 0.0
    %1457 = vmatpush1.msra.mxu0 0.0
    %1458 = vmatprep.subr.mxu0 0.0
    %1459 = vmatpush1.msra.mxu0 0.0
    %1460 = vmatprep.subr.mxu0 0.0
    %1461 = vmatpush1.msra.mxu0 0.0
    %1462 = vmatprep.subr.mxu0 0.0
    %1463 = vmatpush1.msra.mxu0 0.0
    %1464 = vmatprep.subr.mxu0 0.0
    %1465 = vmatpush1.msra.mxu0 0.0
    %1466 = vmatprep.subr.mxu0 0.0
    %1467 = vmatpush1.msra.mxu0 0.0
    %1468 = vmatprep.subr.mxu0 0.0
    %1469 = vmatpush1.msra.mxu0 0.0
    %1470 = vmatprep.subr.mxu0 0.0
    %1471 = vmatpush1.msra.mxu0 0.0
    %1472 = vmatprep.subr.mxu0 0.0
    %1473 = vmatpush1.msra.mxu0 0.0
    %1474 = vmatprep.subr.mxu0 0.0
    %1475 = vmatpush1.msra.mxu0 0.0
    %1476 = vmatprep.subr.mxu0 0.0
    %1477 = vmatpush1.msra.mxu0 0.0
    %1478 = vmatprep.subr.mxu0 0.0
    %1479 = vmatpush1.msra.mxu0 0.0
    %1480 = vmatprep.subr.mxu0 0.0
    %1481 = vmatpush1.msra.mxu0 0.0
    %1482 = vmatprep.subr.mxu0 0.0
    %1483 = vmatpush1.msra.mxu0 0.0
    %1484 = vmatprep.subr.mxu0 0.0
    %1485 = vmatpush1.msra.mxu0 0.0
    %1486 = vmatprep.mubr.f32.mxu0 0.0
    %1487 = vmatmul.mubr.f32.gmra.mrb[0].mxu0 %v1420
    %v1488 = vpop.f32.mrb[0].mxu0
    %v1489 = vadd.f32 0.0, %v1488
    %v1490 = vpop.f32.mrb[0].mxu0
    %1491 = vdwg.mxu0
    %1492 = vrot.lane.b32.xlu0 %v1158, 112
    %v1493 = vpop.permute.xlu0 %1492
    %1494 = vrot.lane.b32.xlu0 %v1158, 80
    %v1495 = vpop.permute.xlu0 %1494
    %v1496 = vsel %vm128, %v1493, 0
    %v1498 = vsel %vm128, %v1495, 0
    %1500 = vmatprep.subr.mxu0 0.0
    %1501 = vmatpush1.xpose.msra.mxu0 %v1498
    %1502 = vmatprep.subr.mxu0 0.0
    %1503 = vmatpush1.xpose.msra.mxu0 0.0
    %1504 = vmatprep.subr.mxu0 0.0
    %1505 = vmatpush1.xpose.msra.mxu0 0.0
    %1506 = vmatprep.subr.mxu0 0.0
    %1507 = vmatpush1.xpose.msra.mxu0 0.0
    %1508 = vmatprep.subr.mxu0 0.0
    %1509 = vmatpush1.xpose.msra.mxu0 0.0
    %1510 = vmatprep.subr.mxu0 0.0
    %1511 = vmatpush1.xpose.msra.mxu0 0.0
    %1512 = vmatprep.subr.mxu0 0.0
    %1513 = vmatpush1.xpose.msra.mxu0 0.0
    %1514 = vmatprep.subr.mxu0 0.0
    %1515 = vmatpush1.xpose.msra.mxu0 0.0
    %1516 = vmatprep.subr.mxu0 0.0
    %1517 = vmatpush1.xpose.msra.mxu0 0.0
    %1518 = vmatprep.subr.mxu0 0.0
    %1519 = vmatpush1.xpose.msra.mxu0 0.0
    %1520 = vmatprep.subr.mxu0 0.0
    %1521 = vmatpush1.xpose.msra.mxu0 0.0
    %1522 = vmatprep.subr.mxu0 0.0
    %1523 = vmatpush1.xpose.msra.mxu0 0.0
    %1524 = vmatprep.subr.mxu0 0.0
    %1525 = vmatpush1.xpose.msra.mxu0 0.0
    %1526 = vmatprep.subr.mxu0 0.0
    %1527 = vmatpush1.xpose.msra.mxu0 0.0
    %1528 = vmatprep.subr.mxu0 0.0
    %1529 = vmatpush1.xpose.msra.mxu0 0.0
    %1530 = vmatprep.subr.mxu0 0.0
    %1531 = vmatpush1.xpose.msra.mxu0 0.0
    %1532 = vmatprep.subr.mxu0 0.0
    %1533 = vmatpush1.xpose.msra.mxu0 0.0
    %1534 = vmatprep.subr.mxu0 0.0
    %1535 = vmatpush1.xpose.msra.mxu0 0.0
    %1536 = vmatprep.subr.mxu0 0.0
    %1537 = vmatpush1.xpose.msra.mxu0 0.0
    %1538 = vmatprep.subr.mxu0 0.0
    %1539 = vmatpush1.xpose.msra.mxu0 0.0
    %1540 = vmatprep.subr.mxu0 0.0
    %1541 = vmatpush1.xpose.msra.mxu0 0.0
    %1542 = vmatprep.subr.mxu0 0.0
    %1543 = vmatpush1.xpose.msra.mxu0 0.0
    %1544 = vmatprep.subr.mxu0 0.0
    %1545 = vmatpush1.xpose.msra.mxu0 0.0
    %1546 = vmatprep.subr.mxu0 0.0
    %1547 = vmatpush1.xpose.msra.mxu0 0.0
    %1548 = vmatprep.subr.mxu0 0.0
    %1549 = vmatpush1.xpose.msra.mxu0 0.0
    %1550 = vmatprep.subr.mxu0 0.0
    %1551 = vmatpush1.xpose.msra.mxu0 0.0
    %1552 = vmatprep.subr.mxu0 0.0
    %1553 = vmatpush1.xpose.msra.mxu0 0.0
    %1554 = vmatprep.subr.mxu0 0.0
    %1555 = vmatpush1.xpose.msra.mxu0 0.0
    %1556 = vmatprep.subr.mxu0 0.0
    %1557 = vmatpush1.xpose.msra.mxu0 0.0
    %1558 = vmatprep.subr.mxu0 0.0
    %1559 = vmatpush1.xpose.msra.mxu0 0.0
    %1560 = vmatprep.subr.mxu0 0.0
    %1561 = vmatpush1.xpose.msra.mxu0 0.0
    %1562 = vmatprep.subr.mxu0 0.0
    %1563 = vmatpush1.xpose.msra.mxu0 0.0
    %1564 = vmatprep.mubr.f32.mxu0 0.0
    %1565 = vmatmul.mubr.f32.gmra.mrb[0].mxu0 %v1496
    %v1566 = vpop.f32.mrb[0].mxu0
    %v1567 = vadd.f32 %v34, %v1566
    %v1568 = vpop.f32.mrb[0].mxu0
    %1569 = vdwg.mxu0
    %v1570 = vsel %vm128, %v1567, -inf
    %1571 = vmax.xlane.f32.xlu0 %v1570
    %v1572 = vpop.xlane.xlu0 %1571
    %v1573 = vsub.f32 %v1567, %v1572
    %v1574 = vmul.f32 %v1573, 1.442695
    %v1575 = vpow.pop %v1574
    %v1576 = vsel %vm128, %v1575, 0.0
    %1577 = vadd.xlane.f32.xlu0 %v1576
    %v1578 = vpop.xlane.xlu0 %1577
    %v1579 = vrcp.pop %v1578
    %v1580 = vmul.f32 %v1575, %v1579
    %1581 = vrot.lane.b32.xlu0 %v1158, 48
    %v1582 = vpop.permute.xlu0 %1581
    %v1585 = vsel %vm128, %v1580, 0
    %1587 = vmatprep.subr.mxu0 0.0
    %1588 = vmatpush1.msra.mxu0 %v1582
    %1589 = vmatprep.subr.mxu0 0.0
    %1590 = vmatpush1.msra.mxu0 0.0
    %1591 = vmatprep.subr.mxu0 0.0
    %1592 = vmatpush1.msra.mxu0 0.0
    %1593 = vmatprep.subr.mxu0 0.0
    %1594 = vmatpush1.msra.mxu0 0.0
    %1595 = vmatprep.subr.mxu0 0.0
    %1596 = vmatpush1.msra.mxu0 0.0
    %1597 = vmatprep.subr.mxu0 0.0
    %1598 = vmatpush1.msra.mxu0 0.0
    %1599 = vmatprep.subr.mxu0 0.0
    %1600 = vmatpush1.msra.mxu0 0.0
    %1601 = vmatprep.subr.mxu0 0.0
    %1602 = vmatpush1.msra.mxu0 0.0
    %1603 = vmatprep.subr.mxu0 0.0
    %1604 = vmatpush1.msra.mxu0 0.0
    %1605 = vmatprep.subr.mxu0 0.0
    %1606 = vmatpush1.msra.mxu0 0.0
    %1607 = vmatprep.subr.mxu0 0.0
    %1608 = vmatpush1.msra.mxu0 0.0
    %1609 = vmatprep.subr.mxu0 0.0
    %1610 = vmatpush1.msra.mxu0 0.0
    %1611 = vmatprep.subr.mxu0 0.0
    %1612 = vmatpush1.msra.mxu0 0.0
    %1613 = vmatprep.subr.mxu0 0.0
    %1614 = vmatpush1.msra.mxu0 0.0
    %1615 = vmatprep.subr.mxu0 0.0
    %1616 = vmatpush1.msra.mxu0 0.0
    %1617 = vmatprep.subr.mxu0 0.0
    %1618 = vmatpush1.msra.mxu0 0.0
    %1619 = vmatprep.subr.mxu0 0.0
    %1620 = vmatpush1.msra.mxu0 0.0
    %1621 = vmatprep.subr.mxu0 0.0
    %1622 = vmatpush1.msra.mxu0 0.0
    %1623 = vmatprep.subr.mxu0 0.0
    %1624 = vmatpush1.msra.mxu0 0.0
    %1625 = vmatprep.subr.mxu0 0.0
    %1626 = vmatpush1.msra.mxu0 0.0
    %1627 = vmatprep.subr.mxu0 0.0
    %1628 = vmatpush1.msra.mxu0 0.0
    %1629 = vmatprep.subr.mxu0 0.0
    %1630 = vmatpush1.msra.mxu0 0.0
    %1631 = vmatprep.subr.mxu0 0.0
    %1632 = vmatpush1.msra.mxu0 0.0
    %1633 = vmatprep.subr.mxu0 0.0
    %1634 = vmatpush1.msra.mxu0 0.0
    %1635 = vmatprep.subr.mxu0 0.0
    %1636 = vmatpush1.msra.mxu0 0.0
    %1637 = vmatprep.subr.mxu0 0.0
    %1638 = vmatpush1.msra.mxu0 0.0
    %1639 = vmatprep.subr.mxu0 0.0
    %1640 = vmatpush1.msra.mxu0 0.0
    %1641 = vmatprep.subr.mxu0 0.0
    %1642 = vmatpush1.msra.mxu0 0.0
    %1643 = vmatprep.subr.mxu0 0.0
    %1644 = vmatpush1.msra.mxu0 0.0
    %1645 = vmatprep.subr.mxu0 0.0
    %1646 = vmatpush1.msra.mxu0 0.0
    %1647 = vmatprep.subr.mxu0 0.0
    %1648 = vmatpush1.msra.mxu0 0.0
    %1649 = vmatprep.subr.mxu0 0.0
    %1650 = vmatpush1.msra.mxu0 0.0
    %1651 = vmatprep.mubr.f32.mxu0 0.0
    %1652 = vmatmul.mubr.f32.gmra.mrb[0].mxu0 %v1585
    %v1653 = vpop.f32.mrb[0].mxu0
    %v1654 = vadd.f32 0.0, %v1653
    %v1655 = vpop.f32.mrb[0].mxu0
    %1656 = vdwg.mxu0
    %1657 = vrot.lane.b32.xlu0 %v1158, 104
    %v1658 = vpop.permute.xlu0 %1657
    %1659 = vrot.lane.b32.xlu0 %v1158, 72
    %v1660 = vpop.permute.xlu0 %1659
    %v1661 = vsel %vm128, %v1658, 0
    %v1663 = vsel %vm128, %v1660, 0
    %1665 = vmatprep.subr.mxu0 0.0
    %1666 = vmatpush1.xpose.msra.mxu0 %v1663
    %1667 = vmatprep.subr.mxu0 0.0
    %1668 = vmatpush1.xpose.msra.mxu0 0.0
    %1669 = vmatprep.subr.mxu0 0.0
    %1670 = vmatpush1.xpose.msra.mxu0 0.0
    %1671 = vmatprep.subr.mxu0 0.0
    %1672 = vmatpush1.xpose.msra.mxu0 0.0
    %1673 = vmatprep.subr.mxu0 0.0
    %1674 = vmatpush1.xpose.msra.mxu0 0.0
    %1675 = vmatprep.subr.mxu0 0.0
    %1676 = vmatpush1.xpose.msra.mxu0 0.0
    %1677 = vmatprep.subr.mxu0 0.0
    %1678 = vmatpush1.xpose.msra.mxu0 0.0
    %1679 = vmatprep.subr.mxu0 0.0
    %1680 = vmatpush1.xpose.msra.mxu0 0.0
    %1681 = vmatprep.subr.mxu0 0.0
    %1682 = vmatpush1.xpose.msra.mxu0 0.0
    %1683 = vmatprep.subr.mxu0 0.0
    %1684 = vmatpush1.xpose.msra.mxu0 0.0
    %1685 = vmatprep.subr.mxu0 0.0
    %1686 = vmatpush1.xpose.msra.mxu0 0.0
    %1687 = vmatprep.subr.mxu0 0.0
    %1688 = vmatpush1.xpose.msra.mxu0 0.0
    %1689 = vmatprep.subr.mxu0 0.0
    %1690 = vmatpush1.xpose.msra.mxu0 0.0
    %1691 = vmatprep.subr.mxu0 0.0
    %1692 = vmatpush1.xpose.msra.mxu0 0.0
    %1693 = vmatprep.subr.mxu0 0.0
    %1694 = vmatpush1.xpose.msra.mxu0 0.0
    %1695 = vmatprep.subr.mxu0 0.0
    %1696 = vmatpush1.xpose.msra.mxu0 0.0
    %1697 = vmatprep.subr.mxu0 0.0
    %1698 = vmatpush1.xpose.msra.mxu0 0.0
    %1699 = vmatprep.subr.mxu0 0.0
    %1700 = vmatpush1.xpose.msra.mxu0 0.0
    %1701 = vmatprep.subr.mxu0 0.0
    %1702 = vmatpush1.xpose.msra.mxu0 0.0
    %1703 = vmatprep.subr.mxu0 0.0
    %1704 = vmatpush1.xpose.msra.mxu0 0.0
    %1705 = vmatprep.subr.mxu0 0.0
    %1706 = vmatpush1.xpose.msra.mxu0 0.0
    %1707 = vmatprep.subr.mxu0 0.0
    %1708 = vmatpush1.xpose.msra.mxu0 0.0
    %1709 = vmatprep.subr.mxu0 0.0
    %1710 = vmatpush1.xpose.msra.mxu0 0.0
    %1711 = vmatprep.subr.mxu0 0.0
    %1712 = vmatpush1.xpose.msra.mxu0 0.0
    %1713 = vmatprep.subr.mxu0 0.0
    %1714 = vmatpush1.xpose.msra.mxu0 0.0
    %1715 = vmatprep.subr.mxu0 0.0
    %1716 = vmatpush1.xpose.msra.mxu0 0.0
    %1717 = vmatprep.subr.mxu0 0.0
    %1718 = vmatpush1.xpose.msra.mxu0 0.0
    %1719 = vmatprep.subr.mxu0 0.0
    %1720 = vmatpush1.xpose.msra.mxu0 0.0
    %1721 = vmatprep.subr.mxu0 0.0
    %1722 = vmatpush1.xpose.msra.mxu0 0.0
    %1723 = vmatprep.subr.mxu0 0.0
    %1724 = vmatpush1.xpose.msra.mxu0 0.0
    %1725 = vmatprep.subr.mxu0 0.0
    %1726 = vmatpush1.xpose.msra.mxu0 0.0
    %1727 = vmatprep.subr.mxu0 0.0
    %1728 = vmatpush1.xpose.msra.mxu0 0.0
    %1729 = vmatprep.mubr.f32.mxu0 0.0
    %1730 = vmatmul.mubr.f32.gmra.mrb[0].mxu0 %v1661
    %v1731 = vpop.f32.mrb[0].mxu0
    %v1732 = vadd.f32 %v34, %v1731
    %v1733 = vpop.f32.mrb[0].mxu0
    %1734 = vdwg.mxu0
    %v1735 = vsel %vm128, %v1732, -inf
    %1736 = vmax.xlane.f32.xlu0 %v1735
    %v1737 = vpop.xlane.xlu0 %1736
    %v1738 = vsub.f32 %v1732, %v1737
    %v1739 = vmul.f32 %v1738, 1.442695
    %v1740 = vpow.pop %v1739
    %v1741 = vsel %vm128, %v1740, 0.0
    %1742 = vadd.xlane.f32.xlu0 %v1741
    %v1743 = vpop.xlane.xlu0 %1742
    %v1744 = vrcp.pop %v1743
    %v1745 = vmul.f32 %v1740, %v1744
    %1746 = vrot.lane.b32.xlu0 %v1158, 40
    %v1747 = vpop.permute.xlu0 %1746
    %v1750 = vsel %vm128, %v1745, 0
    %1752 = vmatprep.subr.mxu0 0.0
    %1753 = vmatpush1.msra.mxu0 %v1747
    %1754 = vmatprep.subr.mxu0 0.0
    %1755 = vmatpush1.msra.mxu0 0.0
    %1756 = vmatprep.subr.mxu0 0.0
    %1757 = vmatpush1.msra.mxu0 0.0
    %1758 = vmatprep.subr.mxu0 0.0
    %1759 = vmatpush1.msra.mxu0 0.0
    %1760 = vmatprep.subr.mxu0 0.0
    %1761 = vmatpush1.msra.mxu0 0.0
    %1762 = vmatprep.subr.mxu0 0.0
    %1763 = vmatpush1.msra.mxu0 0.0
    %1764 = vmatprep.subr.mxu0 0.0
    %1765 = vmatpush1.msra.mxu0 0.0
    %1766 = vmatprep.subr.mxu0 0.0
    %1767 = vmatpush1.msra.mxu0 0.0
    %1768 = vmatprep.subr.mxu0 0.0
    %1769 = vmatpush1.msra.mxu0 0.0
    %1770 = vmatprep.subr.mxu0 0.0
    %1771 = vmatpush1.msra.mxu0 0.0
    %1772 = vmatprep.subr.mxu0 0.0
    %1773 = vmatpush1.msra.mxu0 0.0
    %1774 = vmatprep.subr.mxu0 0.0
    %1775 = vmatpush1.msra.mxu0 0.0
    %1776 = vmatprep.subr.mxu0 0.0
    %1777 = vmatpush1.msra.mxu0 0.0
    %1778 = vmatprep.subr.mxu0 0.0
    %1779 = vmatpush1.msra.mxu0 0.0
    %1780 = vmatprep.subr.mxu0 0.0
    %1781 = vmatpush1.msra.mxu0 0.0
    %1782 = vmatprep.subr.mxu0 0.0
    %1783 = vmatpush1.msra.mxu0 0.0
    %1784 = vmatprep.subr.mxu0 0.0
    %1785 = vmatpush1.msra.mxu0 0.0
    %1786 = vmatprep.subr.mxu0 0.0
    %1787 = vmatpush1.msra.mxu0 0.0
    %1788 = vmatprep.subr.mxu0 0.0
    %1789 = vmatpush1.msra.mxu0 0.0
    %1790 = vmatprep.subr.mxu0 0.0
    %1791 = vmatpush1.msra.mxu0 0.0
    %1792 = vmatprep.subr.mxu0 0.0
    %1793 = vmatpush1.msra.mxu0 0.0
    %1794 = vmatprep.subr.mxu0 0.0
    %1795 = vmatpush1.msra.mxu0 0.0
    %1796 = vmatprep.subr.mxu0 0.0
    %1797 = vmatpush1.msra.mxu0 0.0
    %1798 = vmatprep.subr.mxu0 0.0
    %1799 = vmatpush1.msra.mxu0 0.0
    %1800 = vmatprep.subr.mxu0 0.0
    %1801 = vmatpush1.msra.mxu0 0.0
    %1802 = vmatprep.subr.mxu0 0.0
    %1803 = vmatpush1.msra.mxu0 0.0
    %1804 = vmatprep.subr.mxu0 0.0
    %1805 = vmatpush1.msra.mxu0 0.0
    %1806 = vmatprep.subr.mxu0 0.0
    %1807 = vmatpush1.msra.mxu0 0.0
    %1808 = vmatprep.subr.mxu0 0.0
    %1809 = vmatpush1.msra.mxu0 0.0
    %1810 = vmatprep.subr.mxu0 0.0
    %1811 = vmatpush1.msra.mxu0 0.0
    %1812 = vmatprep.subr.mxu0 0.0
    %1813 = vmatpush1.msra.mxu0 0.0
    %1814 = vmatprep.subr.mxu0 0.0
    %1815 = vmatpush1.msra.mxu0 0.0
    %1816 = vmatprep.mubr.f32.mxu0 0.0
    %1817 = vmatmul.mubr.f32.gmra.mrb[0].mxu0 %v1750
    %v1818 = vpop.f32.mrb[0].mxu0
    %v1819 = vadd.f32 0.0, %v1818
    %v1820 = vpop.f32.mrb[0].mxu0
    %1821 = vdwg.mxu0
    %1823 = vrot.lane.b32.xlu0 %v1489, 8
    %v1824 = vpop.permute.xlu0 %1823
    %1827 = vrot.lane.b32.xlu0 %v1654, 16
    %v1828 = vpop.permute.xlu0 %1827
    %1831 = vrot.lane.b32.xlu0 %v1819, 24
    %v1832 = vpop.permute.xlu0 %1831
    %v1834 = vsel %vm128, %v1324, %v1824
    %v1835 = vsel %vm798, %v1834, %v1828
    %v1836 = vsel %vm800, %v1835, %v1832
    %v1837 = vpack.c.bf16 %v1836, %v1836
    %s1838 = scalar_lea.vmem %s2, 16
    %v1839 = vld [vmem:[%s1838] sm:$0xf]
    %v1840 = vld [vmem:[%s1838 + $0x4] sm:$0xf]
    %v1841 = vld [vmem:[%s1838 + $0x8] sm:$0xf]
    %v1842 = vld [vmem:[%s1838 + $0xc] sm:$0xf]
    %v1843 = vlaneseq
    %v1844 = vshrl.u32 %v1843, 7
    %v1845 = vsub.s32 3, %v1844
    %v1846 = vrot.slane %v1074, %v1845
    %v1851 = vunpack.c.l.b16 %v1839
    %v1852 = vunpack.c.l.b16 %v1840
    %v1853 = vunpack.c.l.b16 %v1841
    %v1854 = vunpack.c.l.b16 %v1842
    %v1855 = vpack.c.b16 %v1852, %v1851
    %v1856 = vpack.c.b16 %v1854, %v1853
    %v1860 = vsel %vm36, %v1837, 0
    %1862 = vmatprep.subr.bf16.mxu0 0
    %1863 = vmatpush1.bf16.msra.mxu0 %v1855
    %1864 = vmatprep.subr.bf16.mxu0 0
    %1865 = vmatpush1.bf16.msra.mxu0 %v1856
    %1866 = vmatprep.subr.bf16.mxu0 0
    %1867 = vmatpush1.bf16.msra.mxu0 0
    %1868 = vmatprep.subr.bf16.mxu0 0
    %1869 = vmatpush1.bf16.msra.mxu0 0
    %1870 = vmatprep.subr.bf16.mxu0 0
    %1871 = vmatpush1.bf16.msra.mxu0 0
    %1872 = vmatprep.subr.bf16.mxu0 0
    %1873 = vmatpush1.bf16.msra.mxu0 0
    %1874 = vmatprep.subr.bf16.mxu0 0
    %1875 = vmatpush1.bf16.msra.mxu0 0
    %1876 = vmatprep.subr.bf16.mxu0 0
    %1877 = vmatpush1.bf16.msra.mxu0 0
    %1878 = vmatprep.subr.bf16.mxu0 0
    %1879 = vmatpush1.bf16.msra.mxu0 0
    %1880 = vmatprep.subr.bf16.mxu0 0
    %1881 = vmatpush1.bf16.msra.mxu0 0
    %1882 = vmatprep.subr.bf16.mxu0 0
    %1883 = vmatpush1.bf16.msra.mxu0 0
    %1884 = vmatprep.subr.bf16.mxu0 0
    %1885 = vmatpush1.bf16.msra.mxu0 0
    %1886 = vmatprep.subr.bf16.mxu0 0
    %1887 = vmatpush1.bf16.msra.mxu0 0
    %1888 = vmatprep.subr.bf16.mxu0 0
    %1889 = vmatpush1.bf16.msra.mxu0 0
    %1890 = vmatprep.subr.bf16.mxu0 0
    %1891 = vmatpush1.bf16.msra.mxu0 0
    %1892 = vmatprep.subr.bf16.mxu0 0
    %1893 = vmatpush1.bf16.msra.mxu0 0
    %1894 = vmatprep.mubr.bf16.mxu0 0
    %1895 = vmatmul.mubr.bf16.gmra.mrb[0].mxu0 %v1860
    %v1896 = vpop.f32.mrb[0].mxu0
    %v1897 = vadd.f32 %v1846, %v1896
    %v1898 = vpop.f32.mrb[0].mxu0
    %v1899 = vpop.f32.mrb[0].mxu0
    %v1900 = vpop.f32.mrb[0].mxu0
    %1901 = vdwg.mxu0
    %v1902 = vadd.f32 %v1072, %v1897
    %v1903 = vsel %vm36, %v1902, 0.0
    %1904 = vadd.xlane.f32.xlu0 %v1903
    %v1905 = vpop.xlane.xlu0 %1904
    %v1906 = vmul.f32 %v1905, %v40
    %v1907 = vsub.f32 %v1902, %v1906
    %v1908 = vmul.f32 %v1907, %v1907
    %v1909 = vsel %vm36, %v1908, 0.0
    %1910 = vadd.xlane.f32.xlu0 %v1909
    %v1911 = vpop.xlane.xlu0 %1910
    %v1912 = vmul.f32 %v1911, %v40
    %v1913 = vadd.f32 %v1912, 1e-05
    %v1914 = vrsqrt.pop %v1913
    %v1915 = vmul.f32 %v1907, %v1914
    %v1916 = vlaneseq
    %v1917 = vshrl.u32 %v1916, 7
    %v1918 = vsub.s32 4, %v1917
    %v1919 = vrot.slane %v1074, %v1918
    %v1920 = vmul.f32 %v1915, %v1919
    %v1921 = vlaneseq
    %v1922 = vshrl.u32 %v1921, 7
    %v1923 = vsub.s32 5, %v1922
    %v1924 = vrot.slane %v1074, %v1923
    %v1925 = vadd.f32 %v1920, %v1924
    %v1926 = vpack.c.bf16 %v1925, %v1925
    %s1927 = scalar_lea.vmem %s3, 16
    %v1928 = vld [vmem:[%s1927] sm:$0xf]
    %v1929 = vld [vmem:[%s1927 + $0x4] sm:$0xf]
    %v1930 = vld [vmem:[%s1927 + $0x8] sm:$0xf]
    %v1931 = vld [vmem:[%s1927 + $0xc] sm:$0xf]
    %v1932 = vlaneseq
    %v1933 = vshrl.u32 %v1932, 7
    %v1934 = vsub.s32 6, %v1933
    %v1935 = vrot.slane %v1074, %v1934
    %v1940 = vunpack.c.l.b16 %v1928
    %v1941 = vunpack.c.l.b16 %v1929
    %v1942 = vunpack.c.l.b16 %v1930
    %v1943 = vunpack.c.l.b16 %v1931
    %v1944 = vpack.c.b16 %v1941, %v1940
    %v1945 = vpack.c.b16 %v1943, %v1942
    %v1949 = vsel %vm36, %v1926, 0
    %1951 = vmatprep.subr.bf16.mxu0 0
    %1952 = vmatpush1.bf16.msra.mxu0 %v1944
    %1953 = vmatprep.subr.bf16.mxu0 0
    %1954 = vmatpush1.bf16.msra.mxu0 %v1945
    %1955 = vmatprep.subr.bf16.mxu0 0
    %1956 = vmatpush1.bf16.msra.mxu0 0
    %1957 = vmatprep.subr.bf16.mxu0 0
    %1958 = vmatpush1.bf16.msra.mxu0 0
    %1959 = vmatprep.subr.bf16.mxu0 0
    %1960 = vmatpush1.bf16.msra.mxu0 0
    %1961 = vmatprep.subr.bf16.mxu0 0
    %1962 = vmatpush1.bf16.msra.mxu0 0
    %1963 = vmatprep.subr.bf16.mxu0 0
    %1964 = vmatpush1.bf16.msra.mxu0 0
    %1965 = vmatprep.subr.bf16.mxu0 0
    %1966 = vmatpush1.bf16.msra.mxu0 0
    %1967 = vmatprep.subr.bf16.mxu0 0
    %1968 = vmatpush1.bf16.msra.mxu0 0
    %1969 = vmatprep.subr.bf16.mxu0 0
    %1970 = vmatpush1.bf16.msra.mxu0 0
    %1971 = vmatprep.subr.bf16.mxu0 0
    %1972 = vmatpush1.bf16.msra.mxu0 0
    %1973 = vmatprep.subr.bf16.mxu0 0
    %1974 = vmatpush1.bf16.msra.mxu0 0
    %1975 = vmatprep.subr.bf16.mxu0 0
    %1976 = vmatpush1.bf16.msra.mxu0 0
    %1977 = vmatprep.subr.bf16.mxu0 0
    %1978 = vmatpush1.bf16.msra.mxu0 0
    %1979 = vmatprep.subr.bf16.mxu0 0
    %1980 = vmatpush1.bf16.msra.mxu0 0
    %1981 = vmatprep.subr.bf16.mxu0 0
    %1982 = vmatpush1.bf16.msra.mxu0 0
    %1983 = vmatprep.mubr.bf16.mxu0 0
    %1984 = vmatmul.mubr.bf16.gmra.mrb[0].mxu0 %v1949
    %v1985 = vpop.f32.mrb[0].mxu0
    %v1986 = vadd.f32 %v1935, %v1985
    %v1987 = vpop.f32.mrb[0].mxu0
    %v1988 = vpop.f32.mrb[0].mxu0
    %v1989 = vpop.f32.mrb[0].mxu0
    %1990 = vdwg.mxu0
    %v1991 = vmul.f32 %v1986, 0.5
    %v1992 = vmul.f32 %v1986, 0.044715
    %v1993 = vmul.f32 %v1992, %v1986
    %v1994 = vmul.f32 %v1993, %v1986
    %v1995 = vadd.f32 %v1986, %v1994
    %v1996 = vmul.f32 %v1995, 0.7978846
    %v1997 = vtanh.pop %v1996
    %v1998 = vadd.f32 %v1997, 1.0
    %v1999 = vmul.f32 %v1991, %v1998
    %v2000 = vpack.c.bf16 %v1999, %v1999
    %s2001 = scalar_lea.vmem %s4, 64
    %v2002 = vld [vmem:[%s2001] sm:$0xf]
    %v2003 = vld [vmem:[%s2001 + $0x4] sm:$0xf]
    %v2004 = vld [vmem:[%s2001 + $0x8] sm:$0xf]
    %v2005 = vld [vmem:[%s2001 + $0xc] sm:$0xf]
    %v2006 = vld [vmem:[%s2001 + $0x10] sm:$0xf]
    %v2007 = vld [vmem:[%s2001 + $0x14] sm:$0xf]
    %v2008 = vld [vmem:[%s2001 + $0x18] sm:$0xf]
    %v2009 = vld [vmem:[%s2001 + $0x1c] sm:$0xf]
    %v2010 = vld [vmem:[%s2001 + $0x20] sm:$0xf]
    %v2011 = vld [vmem:[%s2001 + $0x24] sm:$0xf]
    %v2012 = vld [vmem:[%s2001 + $0x28] sm:$0xf]
    %v2013 = vld [vmem:[%s2001 + $0x2c] sm:$0xf]
    %v2014 = vld [vmem:[%s2001 + $0x30] sm:$0xf]
    %v2015 = vld [vmem:[%s2001 + $0x34] sm:$0xf]
    %v2016 = vld [vmem:[%s2001 + $0x38] sm:$0xf]
    %v2017 = vld [vmem:[%s2001 + $0x3c] sm:$0xf]
    %v2018 = vlaneseq
    %v2019 = vshrl.u32 %v2018, 7
    %v2020 = vsub.s32 7, %v2019
    %v2021 = vrot.slane %v1074, %v2020
    %v2038 = vunpack.c.l.b16 %v2002
    %v2039 = vunpack.c.l.b16 %v2003
    %v2040 = vunpack.c.l.b16 %v2004
    %v2041 = vunpack.c.l.b16 %v2005
    %v2042 = vunpack.c.l.b16 %v2006
    %v2043 = vunpack.c.l.b16 %v2007
    %v2044 = vunpack.c.l.b16 %v2008
    %v2045 = vunpack.c.l.b16 %v2009
    %v2046 = vunpack.c.l.b16 %v2010
    %v2047 = vunpack.c.l.b16 %v2011
    %v2048 = vunpack.c.l.b16 %v2012
    %v2049 = vunpack.c.l.b16 %v2013
    %v2050 = vunpack.c.l.b16 %v2014
    %v2051 = vunpack.c.l.b16 %v2015
    %v2052 = vunpack.c.l.b16 %v2016
    %v2053 = vunpack.c.l.b16 %v2017
    %v2054 = vpack.c.b16 %v2039, %v2038
    %v2055 = vpack.c.b16 %v2041, %v2040
    %v2056 = vpack.c.b16 %v2043, %v2042
    %v2057 = vpack.c.b16 %v2045, %v2044
    %v2058 = vpack.c.b16 %v2047, %v2046
    %v2059 = vpack.c.b16 %v2049, %v2048
    %v2060 = vpack.c.b16 %v2051, %v2050
    %v2061 = vpack.c.b16 %v2053, %v2052
    %2070 = vmatprep.subr.bf16.mxu0 0
    %2071 = vmatpush1.bf16.msra.mxu0 %v2054
    %2072 = vmatprep.subr.bf16.mxu0 0
    %2073 = vmatpush1.bf16.msra.mxu0 %v2055
    %2074 = vmatprep.subr.bf16.mxu0 0
    %2075 = vmatpush1.bf16.msra.mxu0 %v2056
    %2076 = vmatprep.subr.bf16.mxu0 0
    %2077 = vmatpush1.bf16.msra.mxu0 %v2057
    %2078 = vmatprep.subr.bf16.mxu0 0
    %2079 = vmatpush1.bf16.msra.mxu0 %v2058
    %2080 = vmatprep.subr.bf16.mxu0 0
    %2081 = vmatpush1.bf16.msra.mxu0 %v2059
    %2082 = vmatprep.subr.bf16.mxu0 0
    %2083 = vmatpush1.bf16.msra.mxu0 %v2060
    %2084 = vmatprep.subr.bf16.mxu0 0
    %2085 = vmatpush1.bf16.msra.mxu0 %v2061
    %2086 = vmatprep.subr.bf16.mxu0 0
    %2087 = vmatpush1.bf16.msra.mxu0 0
    %2088 = vmatprep.subr.bf16.mxu0 0
    %2089 = vmatpush1.bf16.msra.mxu0 0
    %2090 = vmatprep.subr.bf16.mxu0 0
    %2091 = vmatpush1.bf16.msra.mxu0 0
    %2092 = vmatprep.subr.bf16.mxu0 0
    %2093 = vmatpush1.bf16.msra.mxu0 0
    %2094 = vmatprep.subr.bf16.mxu0 0
    %2095 = vmatpush1.bf16.msra.mxu0 0
    %2096 = vmatprep.subr.bf16.mxu0 0
    %2097 = vmatpush1.bf16.msra.mxu0 0
    %2098 = vmatprep.subr.bf16.mxu0 0
    %2099 = vmatpush1.bf16.msra.mxu0 0
    %2100 = vmatprep.subr.bf16.mxu0 0
    %2101 = vmatpush1.bf16.msra.mxu0 0
    %2102 = vmatprep.mubr.bf16.mxu0 0
    %2103 = vmatmul.mubr.bf16.gmra.mrb[0].mxu0 %v2000
    %v2104 = vpop.f32.mrb[0].mxu0
    %v2105 = vadd.f32 %v2021, %v2104
    %v2106 = vpop.f32.mrb[0].mxu0
    %v2107 = vpop.f32.mrb[0].mxu0
    %v2108 = vpop.f32.mrb[0].mxu0
    %2109 = vdwg.mxu0
    %v2110 = vadd.f32 %v1902, %v2105
    %v2111 = vld [vmem:[%s6] sm:$0x1]
    %v2112 = vld [vmem:[%s6 + $0x1] sm:$0x1]
    %v2113 = vsel %vm36, %v2110, 0.0
    %2114 = vadd.xlane.f32.xlu0 %v2113
    %v2115 = vpop.xlane.xlu0 %2114
    %v2116 = vmul.f32 %v2115, %v40
    %v2117 = vsub.f32 %v2110, %v2116
    %v2118 = vmul.f32 %v2117, %v2117
    %v2119 = vsel %vm36, %v2118, 0.0
    %2120 = vadd.xlane.f32.xlu0 %v2119
    %v2121 = vpop.xlane.xlu0 %2120
    %v2122 = vmul.f32 %v2121, %v40
    %v2123 = vadd.f32 %v2122, 1e-05
    %v2124 = vrsqrt.pop %v2123
    %v2125 = vmul.f32 %v2117, %v2124
    %v2126 = vlaneseq
    %v2127 = vshrl.u32 %v2126, 7
    %v2128 = vsub.s32 0, %v2127
    %v2129 = vrot.slane %v2111, %v2128
    %v2130 = vmul.f32 %v2125, %v2129
    %v2131 = vlaneseq
    %v2132 = vshrl.u32 %v2131, 7
    %v2133 = vsub.s32 0, %v2132
    %v2134 = vrot.slane %v2112, %v2133
    %v2135 = vadd.f32 %v2130, %v2134
    %2136 = vst.msk [vmem:[#allocation2] sm:$0xff] %vm36, %v2135
    // Predicated region
    $region30: #{_forward_jit.1} parent=1 // pred_check
      _
    $region31: #{_forward_jit.1} parent=1 // pred_check_branch
      %2138 = sbr.rel (0) target = $region33
    $region32: #{_forward_jit.1} parent=1 // pred_region
      %s2140 = ssub.s32 128, 128
      %2141 = vsyncadd [#allocation3], %s2140
      %s2143 = sshll.u32 [#allocation2], 4
      %s2144 = int_to_ptr.vmem [resolvable:$true] %s2143
      %2146 = dma.vmem_to_hbm [thread:$0]  %s2144, 128, %s7, [#allocation3]
    $region33: #{_forward_jit.1} parent=1 // pred_fallthru
      _
    // Predicated region
    $region34: #{_forward_jit.1} parent=1 // pred_check
      _
    $region35: #{_forward_jit.1} parent=1 // pred_check_branch
      %2148 = sbr.rel (0) target = $region37
    $region36: #{_forward_jit.1} parent=1 // pred_region
      %2149 = dma.done [#allocation3], 128
    $region37: #{_forward_jit.1} parent=1 // pred_fallthru
      _
    %2150 = vsyncpa [#allocation3], 1

</llo_original>
